<compile_context>
chip_gen: v7x
topology: tpu7x:2x2x1
jax: 0.10.0
libtpu: 0.0.40
codegen_flags: <defaults>
</compile_context>

<pallas_src>
import functools
import math

import jax
import jax.numpy as jnp
from jax.experimental import pallas as pl
from jax.experimental.pallas import tpu as pltpu


def _round_up(x, m):
    return ((x + m - 1) // m) * m


def _attention_kernel(q_ref, k_ref, v_ref,
                      wq_ref, bq_ref, wk_ref, bk_ref,
                      wv_ref, bv_ref, wo_ref, bo_ref,
                      out_ref, attn_ref,
                      *, b_tile, s_len, t_len, t_valid):
    """One grid step processes a tile of `b_tile` batch elements.

    q block: (b_tile*s_len, E_pad) bf16; k/v blocks: (b_tile*t_len, E_pad) bf16.
    Weights are bf16 (MXU-native), biases f32; all matmuls accumulate in f32.
    The 1/sqrt(H) score scale is pre-folded into Wq/bq by the wrapper.
    """
    # Projections: one MXU matmul each, whole batch tile folded into the M dim.
    Q = jnp.dot(q_ref[...], wq_ref[...], preferred_element_type=jnp.float32) + bq_ref[...]
    K = jnp.dot(k_ref[...], wk_ref[...], preferred_element_type=jnp.float32) + bk_ref[...]
    V = jnp.dot(v_ref[...], wv_ref[...], preferred_element_type=jnp.float32) + bv_ref[...]

    h_pad = wq_ref.shape[1]

    # Re-expose the batch axis only for the batched attention contractions.
    # (f32 reshapes split/merge the leading dim at 8-row multiples: no relayout.)
    Q3 = Q.reshape(b_tile, s_len, h_pad)
    K3 = K.reshape(b_tile, t_len, h_pad)
    V3 = V.reshape(b_tile, t_len, h_pad)

    # Scores: contract the last (H) dims directly (no K.T / XLU transpose temp);
    # bf16 operands keep the MXU on its native datapath, f32 accumulation.
    s = jnp.einsum("bsh,bth->bst",
                   Q3.astype(jnp.bfloat16), K3.astype(jnp.bfloat16),
                   preferred_element_type=jnp.float32)            # (B, S_pad, T_pad)

    # Mask padded key columns so they receive exactly zero attention weight.
    if t_valid < t_len:
        col = jax.lax.broadcasted_iota(jnp.int32, s.shape, 2)
        s = jnp.where(col < t_valid, s, -1e30)

    # Softmax with an exact reciprocal (denominator is only (B, S, 1)) so the
    # stored attention rows form a proper distribution.
    s = s - jnp.max(s, axis=-1, keepdims=True)
    e = jnp.exp(s)
    attn = e * (1.0 / jnp.sum(e, axis=-1, keepdims=True))         # (B, S_pad, T_pad) f32

    # attn @ V on bf16 MXU operands, f32 accumulation.
    ctx = jnp.einsum("bst,bth->bsh",
                     attn.astype(jnp.bfloat16), V3.astype(jnp.bfloat16),
                     preferred_element_type=jnp.float32)          # (B, S_pad, H_pad)

    # TODO(synk): dropout is identity here (inference/eval semantics); training-mode
    # dropout would use pltpu.prng_seed + pltpu.prng_random_bits.

    ctx2 = ctx.reshape(b_tile * s_len, h_pad).astype(jnp.bfloat16)
    out = jnp.dot(ctx2, wo_ref[...], preferred_element_type=jnp.float32) + bo_ref[...]

    out_ref[...] = out.astype(out_ref.dtype)                      # (B*S_pad, E_pad)
    attn_ref[...] = attn.reshape(b_tile * s_len, t_len).astype(attn_ref.dtype)


def _vmem_capacity_bytes():
    """Per-TensorCore VMEM capacity; fall back to the smallest generation (v7x: 64 MiB)."""
    try:
        info = pltpu.get_tpu_info()
        cap = int(getattr(info, "vmem_capacity_bytes", 0))
        if cap > 0:
            return cap
    except Exception:
        pass
    return 64 << 20


def _block_vmem_bytes(b, s_p, t_p, e_p, h_p):
    """Approximate per-grid-step VMEM footprint (single copy of each buffer)."""
    bf16, f32 = 2, 4
    blk_in = b * s_p * e_p * bf16 + 2 * b * t_p * e_p * bf16           # q, k, v blocks
    blk_out = b * s_p * e_p * f32 + b * s_p * t_p * f32                # out, attn blocks
    inter = (b * (s_p + 2 * t_p) * h_p                                 # Q, K, V
             + 2 * b * s_p * t_p                                       # scores, exp
             + b * s_p * h_p) * f32                                    # ctx
    return blk_in + blk_out + inter


def _weight_vmem_bytes(e_p, h_p):
    bf16, f32 = 2, 4
    return 4 * e_p * h_p * bf16 + (3 * h_p + e_p) * f32


def _pick_batch_tile(n, s_p, t_p, e_p, h_p, vmem_cap):
    """Largest batch-tile divisor of n that (a) leaves >= 2 grid steps so both
    TensorCores get work on dual-core chips (v7x; costs only one extra ~0.35us
    step on single-core v5e/v6e) and (b) fits the VMEM budget with
    double-buffered I/O.  Bigger tiles amortize per-step overhead."""
    budget = (vmem_cap * 55) // 100
    b_max = max(1, n // 2)
    best = 1
    for b in range(1, b_max + 1):
        if n % b != 0:
            continue
        need = (2 * _weight_vmem_bytes(e_p, h_p)
                + 2 * _block_vmem_bytes(b, s_p, t_p, e_p, h_p))
        if need <= budget:
            best = b
    return best


def attention_forward(query, key, value, params):
    """Forward pass of the Attention module with a single Pallas TPU kernel.

    query: (N, S, E), key/value: (N, T, E)
    returns (out (N, S, E), attention (N, S, T))
    """
    N, S, E = query.shape
    _, T, _ = key.shape
    assert key.shape == value.shape

    wq, bq = params["wq"], params["bq"]        # (E, H), (1, H)
    wk, bk = params["wk"], params["bk"]
    wv, bv = params["wv"], params["bv"]
    wo, bo = params["wo"], params["bo"]        # (H, E), (1, E)
    H = wq.shape[1]
    inv_scale = 1.0 / math.sqrt(float(H))

    # Lane/sublane-friendly padded sizes: last dims to 128 (lane-dense stores +
    # full-width MXU), query rows to the bf16 sublane pack.
    E_p = _round_up(E, 128)
    H_p = _round_up(H, 128)
    T_p = _round_up(T, 128)
    S_p = _round_up(S, 16)

    f32, bf16 = jnp.float32, jnp.bfloat16

    def pad2(a, rows, cols):
        return jnp.pad(a, ((0, rows - a.shape[0]), (0, cols - a.shape[1])))

    # Fold the 1/sqrt(H) score scale into Wq/bq (done once on tiny weight arrays,
    # outside the kernel's hot loop).  Weights bf16, biases stay f32.
    wq_p = pad2(wq.astype(f32) * inv_scale, E_p, H_p).astype(bf16)
    bq_p = pad2(bq.astype(f32) * inv_scale, 1, H_p)
    wk_p = pad2(wk.astype(f32), E_p, H_p).astype(bf16)
    bk_p = pad2(bk.astype(f32), 1, H_p)
    wv_p = pad2(wv.astype(f32), E_p, H_p).astype(bf16)
    bv_p = pad2(bv.astype(f32), 1, H_p)
    wo_p = pad2(wo.astype(f32), H_p, E_p).astype(bf16)
    bo_p = pad2(bo.astype(f32), 1, E_p)

    # Pad + flatten activations; bf16 MXU operands (f32 accumulation in-kernel).
    q2d = jnp.pad(query, ((0, 0), (0, S_p - S), (0, E_p - E))).astype(bf16).reshape(N * S_p, E_p)
    k2d = jnp.pad(key,   ((0, 0), (0, T_p - T), (0, E_p - E))).astype(bf16).reshape(N * T_p, E_p)
    v2d = jnp.pad(value, ((0, 0), (0, T_p - T), (0, E_p - E))).astype(bf16).reshape(N * T_p, E_p)

    vmem_cap = _vmem_capacity_bytes()
    B = _pick_batch_tile(N, S_p, T_p, E_p, H_p, vmem_cap)
    grid = (N // B,)

    need = 2 * _weight_vmem_bytes(E_p, H_p) + 2 * _block_vmem_bytes(B, S_p, T_p, E_p, H_p)
    vmem_limit = int(min(max(2 * need + (8 << 20), 32 << 20), (vmem_cap * 85) // 100))

    kernel = functools.partial(_attention_kernel,
                               b_tile=B, s_len=S_p, t_len=T_p, t_valid=T)

    # Weight/bias blocks are grid-invariant (constant index_map) so they are
    # DMA'd only once; single-buffering them (pipeline_mode=pl.Buffered(1))
    # would additionally halve their VMEM copies on tight-VMEM chips.
    invariant = lambda shape: pl.BlockSpec(shape, lambda n: (0, 0))

    out2d, attn2d = pl.pallas_call(
        kernel,
        out_shape=(
            jax.ShapeDtypeStruct((N * S_p, E_p), query.dtype),
            jax.ShapeDtypeStruct((N * S_p, T_p), jnp.float32),
        ),
        grid_spec=pltpu.PrefetchScalarGridSpec(
            num_scalar_prefetch=0,
            grid=grid,
            in_specs=[
                pl.BlockSpec((B * S_p, E_p), lambda n: (n, 0)),   # query tile
                pl.BlockSpec((B * T_p, E_p), lambda n: (n, 0)),   # key tile
                pl.BlockSpec((B * T_p, E_p), lambda n: (n, 0)),   # value tile
                invariant((E_p, H_p)), invariant((1, H_p)),       # Wq (pre-scaled), bq
                invariant((E_p, H_p)), invariant((1, H_p)),       # Wk, bk
                invariant((E_p, H_p)), invariant((1, H_p)),       # Wv, bv
                invariant((H_p, E_p)), invariant((1, E_p)),       # Wo, bo
            ],
            out_specs=[
                pl.BlockSpec((B * S_p, E_p), lambda n: (n, 0)),
                pl.BlockSpec((B * S_p, T_p), lambda n: (n, 0)),
            ],
        ),
        compiler_params=pltpu.CompilerParams(
            dimension_semantics=("parallel",),
            vmem_limit_bytes=vmem_limit,
        ),
    )(q2d, k2d, v2d, wq_p, bq_p, wk_p, bk_p, wv_p, bv_p, wo_p, bo_p)

    out = out2d.reshape(N, S_p, E_p)[:, :S, :E]
    attn = attn2d.reshape(N, S_p, T_p)[:, :S, :T]
    return out, attn


def init_params(key, embed_dim, hidden_dim):
    """Deterministic PyTorch-Linear-style init: U(-1/sqrt(fan_in), 1/sqrt(fan_in))."""
    ks = jax.random.split(key, 8)

    def linear(kw, kb, fan_in, fan_out):
        bound = 1.0 / math.sqrt(fan_in)
        w = jax.random.uniform(kw, (fan_in, fan_out), jnp.float32, -bound, bound)
        b = jax.random.uniform(kb, (1, fan_out), jnp.float32, -bound, bound)
        return w, b

    wq, bq = linear(ks[0], ks[1], embed_dim, hidden_dim)
    wk, bk = linear(ks[2], ks[3], embed_dim, hidden_dim)
    wv, bv = linear(ks[4], ks[5], embed_dim, hidden_dim)
    wo, bo = linear(ks[6], ks[7], hidden_dim, embed_dim)
    return dict(wq=wq, bq=bq, wk=wk, bk=bk, wv=wv, bv=bv, wo=wo, bo=bo)


def reference_forward(query, key, value, params):
    """Pure-JAX f32 reference matching the PyTorch module (dropout in eval mode)."""
    H = params["wq"].shape[1]
    Q = query @ params["wq"] + params["bq"]
    K = key @ params["wk"] + params["bk"]
    V = value @ params["wv"] + params["bv"]
    s = jnp.einsum("nsh,nth->nst", Q, K) / jnp.sqrt(jnp.float32(H))
    attn = jax.nn.softmax(s, axis=-1)
    ctx = jnp.einsum("nst,nth->nsh", attn, V)
    out = ctx @ params["wo"] + params["bo"]
    return out, attn


if __name__ == "__main__":
    # Small shapes consistent with the module's forward signature.
    N, S, T = 4, 8, 8
    embed_dim, hidden_dim = 32, 32

    root = jax.random.PRNGKey(0)
    k_params, k_q, k_k, k_v = jax.random.split(root, 4)

    params = init_params(k_params, embed_dim, hidden_dim)
    query = jax.random.normal(k_q, (N, S, embed_dim), jnp.float32)
    key = jax.random.normal(k_k, (N, T, embed_dim), jnp.float32)
    value = jax.random.normal(k_v, (N, T, embed_dim), jnp.float32)

    out, attn = attention_forward(query, key, value, params)
    out = jax.block_until_ready(out)
    attn = jax.block_until_ready(attn)

    ref_out, ref_attn = reference_forward(query, key, value, params)
    assert out.shape == (N, S, embed_dim)
    assert attn.shape == (N, S, T)
    # bf16 MXU operands with f32 accumulation -> ~1e-3..1e-2 error vs the f32 reference.
    assert jnp.allclose(out, ref_out, atol=2e-2, rtol=2e-2)
    assert jnp.allclose(attn, ref_attn, atol=2e-2, rtol=2e-2)
    # Returned attention rows are a proper distribution (exact softmax reciprocal,
    # padded key columns masked to zero weight).
    assert jnp.allclose(attn.sum(-1), 1.0, atol=1e-3)

    print("KERNEL_OK")
</pallas_src>

<mosaic_0001>
module attributes {stable_mosaic.version = 11 : i64} {
  func.func @_attention_kernel(%arg0: i32, %arg1: memref<32x128xbf16, #tpu.memory_space<vmem>>, %arg2: memref<256x128xbf16, #tpu.memory_space<vmem>>, %arg3: memref<256x128xbf16, #tpu.memory_space<vmem>>, %arg4: memref<128x128xbf16, #tpu.memory_space<vmem>>, %arg5: memref<1x128xf32, #tpu.memory_space<vmem>>, %arg6: memref<128x128xbf16, #tpu.memory_space<vmem>>, %arg7: memref<1x128xf32, #tpu.memory_space<vmem>>, %arg8: memref<128x128xbf16, #tpu.memory_space<vmem>>, %arg9: memref<1x128xf32, #tpu.memory_space<vmem>>, %arg10: memref<128x128xbf16, #tpu.memory_space<vmem>>, %arg11: memref<1x128xf32, #tpu.memory_space<vmem>>, %arg12: memref<32x128xf32, #tpu.memory_space<vmem>>, %arg13: memref<32x128xf32, #tpu.memory_space<vmem>>) attributes {dimension_semantics = [#tpu.dimension_semantics<parallel>], iteration_bounds = array<i64: 2>, scalar_prefetch = 0 : i64, scratch_operands = 0 : i64, tpu.core_type = #tpu.core_type<tc>, window_params = [{transform_indices = @transform_0, window_bounds = array<i64: 32, 128>}, {transform_indices = @transform_1, window_bounds = array<i64: 256, 128>}, {transform_indices = @transform_2, window_bounds = array<i64: 256, 128>}, {pipeline_mode = #tpu.pipeline_mode<synchronous>, transform_indices = @transform_3, window_bounds = array<i64: 128, 128>}, {pipeline_mode = #tpu.pipeline_mode<synchronous>, transform_indices = @transform_4, window_bounds = array<i64: 1, 128>}, {pipeline_mode = #tpu.pipeline_mode<synchronous>, transform_indices = @transform_5, window_bounds = array<i64: 128, 128>}, {pipeline_mode = #tpu.pipeline_mode<synchronous>, transform_indices = @transform_6, window_bounds = array<i64: 1, 128>}, {pipeline_mode = #tpu.pipeline_mode<synchronous>, transform_indices = @transform_7, window_bounds = array<i64: 128, 128>}, {pipeline_mode = #tpu.pipeline_mode<synchronous>, transform_indices = @transform_8, window_bounds = array<i64: 1, 128>}, {pipeline_mode = #tpu.pipeline_mode<synchronous>, transform_indices = @transform_9, window_bounds = array<i64: 128, 128>}, {pipeline_mode = #tpu.pipeline_mode<synchronous>, transform_indices = @transform_10, window_bounds = array<i64: 1, 128>}, {transform_indices = @transform_11, window_bounds = array<i64: 32, 128>}, {transform_indices = @transform_12, window_bounds = array<i64: 32, 128>}]} {
    %c0 = arith.constant 0 : index
    %c0_0 = arith.constant 0 : index
    %0 = vector.load %arg1[%c0, %c0_0] : memref<32x128xbf16, #tpu.memory_space<vmem>>, vector<32x128xbf16>
    %c0_1 = arith.constant 0 : index
    %c0_2 = arith.constant 0 : index
    %1 = vector.load %arg4[%c0_1, %c0_2] : memref<128x128xbf16, #tpu.memory_space<vmem>>, vector<128x128xbf16>
    %cst = arith.constant dense<0.000000e+00> : vector<32x128xf32>
    %2 = tpu.matmul %0, %1, %cst {dimension_numbers = #tpu.dot_dimension_numbers<[1], [0], [0], [1], [0, 0, 1, 1], [], []>} : vector<32x128xbf16>, vector<128x128xbf16>, vector<32x128xf32> -> vector<32x128xf32>
    %c0_3 = arith.constant 0 : index
    %c0_4 = arith.constant 0 : index
    %3 = vector.load %arg5[%c0_3, %c0_4] : memref<1x128xf32, #tpu.memory_space<vmem>>, vector<1x128xf32>
    %4 = vector.broadcast %3 : vector<1x128xf32> to vector<32x128xf32>
    %5 = arith.addf %2, %4 : vector<32x128xf32>
    %c0_5 = arith.constant 0 : index
    %c0_6 = arith.constant 0 : index
    %6 = vector.load %arg2[%c0_5, %c0_6] : memref<256x128xbf16, #tpu.memory_space<vmem>>, vector<256x128xbf16>
    %c0_7 = arith.constant 0 : index
    %c0_8 = arith.constant 0 : index
    %7 = vector.load %arg6[%c0_7, %c0_8] : memref<128x128xbf16, #tpu.memory_space<vmem>>, vector<128x128xbf16>
    %cst_9 = arith.constant dense<0.000000e+00> : vector<256x128xf32>
    %8 = tpu.matmul %6, %7, %cst_9 {dimension_numbers = #tpu.dot_dimension_numbers<[1], [0], [0], [1], [0, 0, 1, 1], [], []>} : vector<256x128xbf16>, vector<128x128xbf16>, vector<256x128xf32> -> vector<256x128xf32>
    %c0_10 = arith.constant 0 : index
    %c0_11 = arith.constant 0 : index
    %9 = vector.load %arg7[%c0_10, %c0_11] : memref<1x128xf32, #tpu.memory_space<vmem>>, vector<1x128xf32>
    %10 = vector.broadcast %9 : vector<1x128xf32> to vector<256x128xf32>
    %11 = arith.addf %8, %10 : vector<256x128xf32>
    %c0_12 = arith.constant 0 : index
    %c0_13 = arith.constant 0 : index
    %12 = vector.load %arg3[%c0_12, %c0_13] : memref<256x128xbf16, #tpu.memory_space<vmem>>, vector<256x128xbf16>
    %c0_14 = arith.constant 0 : index
    %c0_15 = arith.constant 0 : index
    %13 = vector.load %arg8[%c0_14, %c0_15] : memref<128x128xbf16, #tpu.memory_space<vmem>>, vector<128x128xbf16>
    %cst_16 = arith.constant dense<0.000000e+00> : vector<256x128xf32>
    %14 = tpu.matmul %12, %13, %cst_16 {dimension_numbers = #tpu.dot_dimension_numbers<[1], [0], [0], [1], [0, 0, 1, 1], [], []>} : vector<256x128xbf16>, vector<128x128xbf16>, vector<256x128xf32> -> vector<256x128xf32>
    %c0_17 = arith.constant 0 : index
    %c0_18 = arith.constant 0 : index
    %15 = vector.load %arg9[%c0_17, %c0_18] : memref<1x128xf32, #tpu.memory_space<vmem>>, vector<1x128xf32>
    %16 = vector.broadcast %15 : vector<1x128xf32> to vector<256x128xf32>
    %17 = arith.addf %14, %16 : vector<256x128xf32>
    %18 = vector.shape_cast %5 : vector<32x128xf32> to vector<2x16x128xf32>
    %19 = vector.shape_cast %11 : vector<256x128xf32> to vector<2x128x128xf32>
    %20 = vector.shape_cast %17 : vector<256x128xf32> to vector<2x128x128xf32>
    %21 = arith.truncf %18 : vector<2x16x128xf32> to vector<2x16x128xbf16>
    %22 = arith.truncf %19 : vector<2x128x128xf32> to vector<2x128x128xbf16>
    "tpu.trace_start"() <{level = 10 : i32, message = "bsh,bth->bst"}> : () -> ()
    %cst_19 = arith.constant dense<0.000000e+00> : vector<2x16x128xf32>
    %23 = tpu.matmul %21, %22, %cst_19 {dimension_numbers = #tpu.dot_dimension_numbers<[2], [2], [1], [1], [0, 0, 0, 1, 1, 1], [0], [0]>} : vector<2x16x128xbf16>, vector<2x128x128xbf16>, vector<2x16x128xf32> -> vector<2x16x128xf32>
    "tpu.trace_stop"() : () -> ()
    %24 = tpu.iota {dimensions = array<i32: 2>} : vector<2x16x128xi32>
    %c8_i32 = arith.constant 8 : i32
    %25 = vector.broadcast %c8_i32 : i32 to vector<2x16x128xi32>
    %26 = arith.cmpi slt, %24, %25 : vector<2x16x128xi32>
    %cst_20 = arith.constant -1.000000e+30 : f32
    %27 = vector.broadcast %cst_20 : f32 to vector<2x16x128xf32>
    %28 = arith.select %26, %23, %27 : vector<2x16x128xi1>, vector<2x16x128xf32>
    %cst_21 = arith.constant dense<0xFF800000> : vector<2x16xf32>
    %29 = vector.multi_reduction <maximumf>, %28, %cst_21 [2] : vector<2x16x128xf32> to vector<2x16xf32>
    %30 = vector.shape_cast %29 : vector<2x16xf32> to vector<2x16x1xf32>
    %31 = vector.broadcast %30 : vector<2x16x1xf32> to vector<2x16x128xf32>
    %32 = arith.subf %28, %31 : vector<2x16x128xf32>
    %33 = math.exp %32 : vector<2x16x128xf32>
    %cst_22 = arith.constant dense<0.000000e+00> : vector<2x16xf32>
    %34 = vector.multi_reduction <add>, %33, %cst_22 [2] : vector<2x16x128xf32> to vector<2x16xf32>
    %35 = vector.shape_cast %34 : vector<2x16xf32> to vector<2x16x1xf32>
    %cst_23 = arith.constant 1.000000e+00 : f32
    %36 = vector.broadcast %cst_23 : f32 to vector<2x16x1xf32>
    %37 = arith.divf %36, %35 : vector<2x16x1xf32>
    %38 = vector.broadcast %37 : vector<2x16x1xf32> to vector<2x16x128xf32>
    %39 = arith.mulf %33, %38 : vector<2x16x128xf32>
    %40 = arith.truncf %39 : vector<2x16x128xf32> to vector<2x16x128xbf16>
    %41 = arith.truncf %20 : vector<2x128x128xf32> to vector<2x128x128xbf16>
    "tpu.trace_start"() <{level = 10 : i32, message = "bst,bth->bsh"}> : () -> ()
    %cst_24 = arith.constant dense<0.000000e+00> : vector<2x16x128xf32>
    %42 = tpu.matmul %40, %41, %cst_24 {dimension_numbers = #tpu.dot_dimension_numbers<[2], [1], [1], [2], [0, 0, 0, 1, 1, 2], [0], [0]>} : vector<2x16x128xbf16>, vector<2x128x128xbf16>, vector<2x16x128xf32> -> vector<2x16x128xf32>
    "tpu.trace_stop"() : () -> ()
    %43 = vector.shape_cast %42 : vector<2x16x128xf32> to vector<32x128xf32>
    %44 = arith.truncf %43 : vector<32x128xf32> to vector<32x128xbf16>
    %c0_25 = arith.constant 0 : index
    %c0_26 = arith.constant 0 : index
    %45 = vector.load %arg10[%c0_25, %c0_26] : memref<128x128xbf16, #tpu.memory_space<vmem>>, vector<128x128xbf16>
    %cst_27 = arith.constant dense<0.000000e+00> : vector<32x128xf32>
    %46 = tpu.matmul %44, %45, %cst_27 {dimension_numbers = #tpu.dot_dimension_numbers<[1], [0], [0], [1], [0, 0, 1, 1], [], []>} : vector<32x128xbf16>, vector<128x128xbf16>, vector<32x128xf32> -> vector<32x128xf32>
    %c0_28 = arith.constant 0 : index
    %c0_29 = arith.constant 0 : index
    %47 = vector.load %arg11[%c0_28, %c0_29] : memref<1x128xf32, #tpu.memory_space<vmem>>, vector<1x128xf32>
    %48 = vector.broadcast %47 : vector<1x128xf32> to vector<32x128xf32>
    %49 = arith.addf %46, %48 : vector<32x128xf32>
    %c0_30 = arith.constant 0 : index
    %c0_31 = arith.constant 0 : index
    %50 = vector.load %arg12[%c0_30, %c0_31] : memref<32x128xf32, #tpu.memory_space<vmem>>, vector<32x128xf32>
    tpu.vector_store %arg12[%c0_30, %c0_31], %49 {strides = array<i32>} : memref<32x128xf32, #tpu.memory_space<vmem>>, vector<32x128xf32>,
    %51 = vector.shape_cast %39 : vector<2x16x128xf32> to vector<32x128xf32>
    %c0_32 = arith.constant 0 : index
    %c0_33 = arith.constant 0 : index
    %52 = vector.load %arg13[%c0_32, %c0_33] : memref<32x128xf32, #tpu.memory_space<vmem>>, vector<32x128xf32>
    tpu.vector_store %arg13[%c0_32, %c0_33], %51 {strides = array<i32>} : memref<32x128xf32, #tpu.memory_space<vmem>>, vector<32x128xf32>,
    return
  }
  func.func @transform_0(%arg0: i32) -> (i32, i32) {
    %c0_i32 = arith.constant 0 : i32
    %c0_i32_0 = arith.constant 0 : i32
    return %arg0, %c0_i32 : i32, i32
  }
  func.func @transform_1(%arg0: i32) -> (i32, i32) {
    %c0_i32 = arith.constant 0 : i32
    %c0_i32_0 = arith.constant 0 : i32
    return %arg0, %c0_i32 : i32, i32
  }
  func.func @transform_2(%arg0: i32) -> (i32, i32) {
    %c0_i32 = arith.constant 0 : i32
    %c0_i32_0 = arith.constant 0 : i32
    return %arg0, %c0_i32 : i32, i32
  }
  func.func @transform_3(%arg0: i32) -> (i32, i32) {
    %c0_i32 = arith.constant 0 : i32
    %c0_i32_0 = arith.constant 0 : i32
    %c0_i32_1 = arith.constant 0 : i32
    return %c0_i32, %c0_i32_0 : i32, i32
  }
  func.func @transform_4(%arg0: i32) -> (i32, i32) {
    %c0_i32 = arith.constant 0 : i32
    %c0_i32_0 = arith.constant 0 : i32
    %c0_i32_1 = arith.constant 0 : i32
    return %c0_i32, %c0_i32_0 : i32, i32
  }
  func.func @transform_5(%arg0: i32) -> (i32, i32) {
    %c0_i32 = arith.constant 0 : i32
    %c0_i32_0 = arith.constant 0 : i32
    %c0_i32_1 = arith.constant 0 : i32
    return %c0_i32, %c0_i32_0 : i32, i32
  }
  func.func @transform_6(%arg0: i32) -> (i32, i32) {
    %c0_i32 = arith.constant 0 : i32
    %c0_i32_0 = arith.constant 0 : i32
    %c0_i32_1 = arith.constant 0 : i32
    return %c0_i32, %c0_i32_0 : i32, i32
  }
  func.func @transform_7(%arg0: i32) -> (i32, i32) {
    %c0_i32 = arith.constant 0 : i32
    %c0_i32_0 = arith.constant 0 : i32
    %c0_i32_1 = arith.constant 0 : i32
    return %c0_i32, %c0_i32_0 : i32, i32
  }
  func.func @transform_8(%arg0: i32) -> (i32, i32) {
    %c0_i32 = arith.constant 0 : i32
    %c0_i32_0 = arith.constant 0 : i32
    %c0_i32_1 = arith.constant 0 : i32
    return %c0_i32, %c0_i32_0 : i32, i32
  }
  func.func @transform_9(%arg0: i32) -> (i32, i32) {
    %c0_i32 = arith.constant 0 : i32
    %c0_i32_0 = arith.constant 0 : i32
    %c0_i32_1 = arith.constant 0 : i32
    return %c0_i32, %c0_i32_0 : i32, i32
  }
  func.func @transform_10(%arg0: i32) -> (i32, i32) {
    %c0_i32 = arith.constant 0 : i32
    %c0_i32_0 = arith.constant 0 : i32
    %c0_i32_1 = arith.constant 0 : i32
    return %c0_i32, %c0_i32_0 : i32, i32
  }
  func.func @transform_11(%arg0: i32) -> (i32, i32) {
    %c0_i32 = arith.constant 0 : i32
    %c0_i32_0 = arith.constant 0 : i32
    return %arg0, %c0_i32 : i32, i32
  }
  func.func @transform_12(%arg0: i32) -> (i32, i32) {
    %c0_i32 = arith.constant 0 : i32
    %c0_i32_0 = arith.constant 0 : i32
    return %arg0, %c0_i32 : i32, i32
  }
}

</mosaic_0001>

<llo_original>
// kernel: tpu_custom_call.1
$region0: #{tpu_custom_call.1}
  #allocation0 [shape = 'u32[]', space=smem, size = 0x4, offset = 0x4, fixed_abs, tag = 'smem constant byte address 0x4 - core index']
  #allocation1 [shape = 'u32[144,128]{1,0:T(1,128)}', space=vmem, size = 0x12000, scoped, tag = 'internal scratch']
  %s0 = inlined_call_operand.hbm [shape: bf16[64,128], index: 0, kind: input, shape index: {}]
  %s1 = inlined_call_operand.hbm [shape: bf16[512,128], index: 1, kind: input, shape index: {}]
  %s2 = inlined_call_operand.hbm [shape: bf16[512,128], index: 2, kind: input, shape index: {}]
  %s3 = inlined_call_operand.hbm [shape: bf16[128,128], index: 3, kind: input, shape index: {}]
  %s4 = inlined_call_operand.vmem [shape: f32[1,128], index: 4, kind: input, shape index: {}]
  %s5 = inlined_call_operand.hbm [shape: bf16[128,128], index: 5, kind: input, shape index: {}]
  %s6 = inlined_call_operand.vmem [shape: f32[1,128], index: 6, kind: input, shape index: {}]
  %s7 = inlined_call_operand.hbm [shape: bf16[128,128], index: 7, kind: input, shape index: {}]
  %s8 = inlined_call_operand.vmem [shape: f32[1,128], index: 8, kind: input, shape index: {}]
  %s9 = inlined_call_operand.hbm [shape: bf16[128,128], index: 9, kind: input, shape index: {}]
  %s10 = inlined_call_operand.vmem [shape: f32[1,128], index: 10, kind: input, shape index: {}]
  %s11 = inlined_call_operand.hbm [shape: f32[64,128], index: 11, kind: output, shape index: {0}]
  %s12 = inlined_call_operand.hbm [shape: f32[64,128], index: 12, kind: output, shape index: {1}]
  %13 = xla_tuple %s11, %s12
  %s14 = sld [smem:[#allocation0]]
  $region113: #{tpu_custom_call.1} parent=0
    _
  %s16 = ssub.s32 1, %s14
  %s17 = scalar_select 0, %s16, %s14
  $region1: #{tpu_custom_call.1} parent=0
    #allocation2 [shape = 'u8[16384]{0}', space=vmem, size = 0x4000, scoped, tag = 'input window, operand 0']
    #allocation3 [shape = 's32[2]{0}', space=sflag, size = 0x8, scoped, tag = 'scoped memory for tpu_custom_call.1']
    #allocation4 [shape = 's32[2]{0}', space=sflag, size = 0x8, scoped, tag = 'scoped memory for tpu_custom_call.1']
    #allocation5 [shape = 'u8[131072]{0}', space=vmem, size = 0x20000, scoped, tag = 'input window, operand 1']
    #allocation6 [shape = 's32[2]{0}', space=sflag, size = 0x8, scoped, tag = 'scoped memory for tpu_custom_call.1']
    #allocation7 [shape = 'u8[131072]{0}', space=vmem, size = 0x20000, scoped, tag = 'input window, operand 2']
    #allocation8 [shape = 'u8[32768]{0}', space=vmem, size = 0x8000, scoped, tag = 'input window, operand 3, single buffered']
    #allocation9 [shape = 's32[1]{0}', space=sflag, size = 0x4, scoped, tag = 'scoped memory for tpu_custom_call.1']
    #allocation10 [shape = 'u8[32768]{0}', space=vmem, size = 0x8000, scoped, tag = 'input window, operand 5, single buffered']
    #allocation11 [shape = 'u8[32768]{0}', space=vmem, size = 0x8000, scoped, tag = 'input window, operand 7, single buffered']
    #allocation12 [shape = 's32[1]{0}', space=sflag, size = 0x4, scoped, tag = 'scoped memory for tpu_custom_call.1']
    #allocation13 [shape = 'u8[32768]{0}', space=vmem, size = 0x8000, scoped, tag = 'input window, operand 9, single buffered']
    #allocation14 [shape = 'u8[32768]{0}', space=vmem, size = 0x8000, scoped, tag = 'output window, operand 0']
    #allocation15 [shape = 'u8[32768]{0}', space=vmem, size = 0x8000, scoped, tag = 'output window, operand 1']
    #allocation16 [shape = 's32[2]{0}', space=sflag, size = 0x8, scoped, tag = 'scoped memory for tpu_custom_call.1']
    %18 = vsyncpa [#allocation3], 0
    %s19 = scalar_lea.sflag [#allocation3], 1
    %20 = vsyncpa %s19, 0
    %21 = vsyncpa [#allocation6], 0
    %s22 = scalar_lea.sflag [#allocation6], 1
    %23 = vsyncpa %s22, 0
    %24 = vsyncpa [#allocation9], 0
    %25 = vsyncpa [#allocation12], 0
    %26 = vsyncpa [#allocation4], 0
    %s27 = scalar_lea.sflag [#allocation4], 1
    %28 = vsyncpa %s27, 0
    %29 = vsyncpa [#allocation16], 0
    %s30 = scalar_lea.sflag [#allocation16], 1
    %31 = vsyncpa %s30, 0
    loop: start=0, step=1, limit=4
    $region2: #{tpu_custom_call.1} parent=1 // loop_pre_header
      _
    $region3: #{tpu_custom_call.1} parent=1 // loop_header
      %s33 = sphi 0, %s37
      %p34 = scmp.ge.s32.totalorder %s33, 4
      %s43 = sphi 0, %s45
      %s46 = sphi 0, %s43
      %s47 = sphi 0, %s46
      %s63 = sphi 0, %s47
      %s69 = sphi 0, %s71
      %s72 = sphi 0, %s69
      %s73 = sphi 0, %s72
      %s89 = sphi 0, %s73
      %s95 = sphi 0, %s97
      %s98 = sphi 0, %s95
      %s99 = sphi 0, %s98
      %s115 = sphi 0, %s99
      %s119 = sphi 0, %s119
      %s121 = sphi 0, %s119
      %s122 = sphi 0, %s121
      %s136 = sphi 0, %s122
      %s140 = sphi 0, %s140
      %s142 = sphi 0, %s140
      %s143 = sphi 0, %s142
      %s157 = sphi 0, %s143
      %s161 = sphi 0, %s161
      %s163 = sphi 0, %s161
      %s164 = sphi 0, %s163
      %s178 = sphi 0, %s164
      %s182 = sphi 0, %s182
      %s184 = sphi 0, %s182
      %s185 = sphi 0, %s184
      %s199 = sphi 0, %s185
      %s203 = sphi 0, %s203
      %s205 = sphi 0, %s203
      %s206 = sphi 0, %s205
      %s220 = sphi 0, %s206
      %s224 = sphi 0, %s224
      %s226 = sphi 0, %s224
      %s227 = sphi 0, %s226
      %s241 = sphi 0, %s227
      %s245 = sphi 0, %s245
      %s247 = sphi 0, %s245
      %s248 = sphi 0, %s247
      %s262 = sphi 0, %s248
      %s266 = sphi 0, %s266
      %s268 = sphi 0, %s266
      %s269 = sphi 0, %s268
      %s283 = sphi 0, %s269
      %s289 = sphi 0, %s291
      %s292 = sphi 0, %s289
      %s293 = sphi 0, %s292
      %s309 = sphi 0, %s293
      %s315 = sphi 0, %s317
      %s318 = sphi 0, %s315
      %s319 = sphi 0, %s318
      %s335 = sphi 0, %s319
    $region4: #{tpu_custom_call.1} parent=1 // loop_header_branch
      %36 = sbr.rel (%p34) target = $region8
    $region5: #{tpu_custom_call.1} parent=1 // loop_body
      %s38 = ssub.s32 %s33, 1
      %s39 = ssub.s32 %s33, 2
      %s40 = sadd.s32 %s33, 1
      %s41 = ssub.s32 %s33, %s40
      %p42 = scmp.eq.s32.totalorder %s41, 0
      %s44 = sadd.s32 %s43, 1
      %s45 = scalar_select %p42, %s43, %s44
      %p48 = pneg %p42
      %p49 = scmp.eq.s32.totalorder %s33, 1
      %p50 = por %p48, %p49
      %p51 = scmp.ne.s32.totalorder %s43, %s46
      %p52 = scmp.eq.s32.totalorder %s33, 0
      %p53 = por %p51, %p52
      %p54 = scmp.ne.s32.totalorder %s43, %s46
      %p55 = scmp.eq.s32.totalorder %s38, 1
      %p56 = por %p54, %p55
      %p57 = scmp.ne.s32.totalorder %s46, %s47
      %p58 = scmp.eq.s32.totalorder %s38, 0
      %p59 = por %p57, %p58
      %p60 = scmp.ne.s32.totalorder %s46, %s47
      %p61 = scmp.eq.s32.totalorder %s39, 1
      %p62 = por %p60, %p61
      %p64 = scmp.ne.s32.totalorder %s47, %s63
      %p65 = scmp.eq.s32.totalorder %s39, 0
      %p66 = por %p64, %p65
      %s67 = ssub.s32 %s33, %s40
      %p68 = scmp.eq.s32.totalorder %s67, 0
      %s70 = sadd.s32 %s69, 1
      %s71 = scalar_select %p68, %s69, %s70
      %p74 = pneg %p68
      %p75 = scmp.eq.s32.totalorder %s33, 1
      %p76 = por %p74, %p75
      %p77 = scmp.ne.s32.totalorder %s69, %s72
      %p78 = scmp.eq.s32.totalorder %s33, 0
      %p79 = por %p77, %p78
      %p80 = scmp.ne.s32.totalorder %s69, %s72
      %p81 = scmp.eq.s32.totalorder %s38, 1
      %p82 = por %p80, %p81
      %p83 = scmp.ne.s32.totalorder %s72, %s73
      %p84 = scmp.eq.s32.totalorder %s38, 0
      %p85 = por %p83, %p84
      %p86 = scmp.ne.s32.totalorder %s72, %s73
      %p87 = scmp.eq.s32.totalorder %s39, 1
      %p88 = por %p86, %p87
      %p90 = scmp.ne.s32.totalorder %s73, %s89
      %p91 = scmp.eq.s32.totalorder %s39, 0
      %p92 = por %p90, %p91
      %s93 = ssub.s32 %s33, %s40
      %p94 = scmp.eq.s32.totalorder %s93, 0
      %s96 = sadd.s32 %s95, 1
      %s97 = scalar_select %p94, %s95, %s96
      %p100 = pneg %p94
      %p101 = scmp.eq.s32.totalorder %s33, 1
      %p102 = por %p100, %p101
      %p103 = scmp.ne.s32.totalorder %s95, %s98
      %p104 = scmp.eq.s32.totalorder %s33, 0
      %p105 = por %p103, %p104
      %p106 = scmp.ne.s32.totalorder %s95, %s98
      %p107 = scmp.eq.s32.totalorder %s38, 1
      %p108 = por %p106, %p107
      %p109 = scmp.ne.s32.totalorder %s98, %s99
      %p110 = scmp.eq.s32.totalorder %s38, 0
      %p111 = por %p109, %p110
      %p112 = scmp.ne.s32.totalorder %s98, %s99
      %p113 = scmp.eq.s32.totalorder %s39, 1
      %p114 = por %p112, %p113
      %p116 = scmp.ne.s32.totalorder %s99, %s115
      %p117 = scmp.eq.s32.totalorder %s39, 0
      %p118 = por %p116, %p117
      %s120 = sadd.s32 %s119, 1
      %p123 = scmp.eq.s32.totalorder %s33, 1
      %p124 = scmp.ne.s32.totalorder %s119, %s121
      %p125 = scmp.eq.s32.totalorder %s33, 0
      %p126 = por %p124, %p125
      %p127 = scmp.ne.s32.totalorder %s119, %s121
      %p128 = scmp.eq.s32.totalorder %s38, 1
      %p129 = por %p127, %p128
      %p130 = scmp.ne.s32.totalorder %s121, %s122
      %p131 = scmp.eq.s32.totalorder %s38, 0
      %p132 = por %p130, %p131
      %p133 = scmp.ne.s32.totalorder %s121, %s122
      %p134 = scmp.eq.s32.totalorder %s39, 1
      %p135 = por %p133, %p134
      %p137 = scmp.ne.s32.totalorder %s122, %s136
      %p138 = scmp.eq.s32.totalorder %s39, 0
      %p139 = por %p137, %p138
      %s141 = sadd.s32 %s140, 1
      %p144 = scmp.eq.s32.totalorder %s33, 1
      %p145 = scmp.ne.s32.totalorder %s140, %s142
      %p146 = scmp.eq.s32.totalorder %s33, 0
      %p147 = por %p145, %p146
      %p148 = scmp.ne.s32.totalorder %s140, %s142
      %p149 = scmp.eq.s32.totalorder %s38, 1
      %p150 = por %p148, %p149
      %p151 = scmp.ne.s32.totalorder %s142, %s143
      %p152 = scmp.eq.s32.totalorder %s38, 0
      %p153 = por %p151, %p152
      %p154 = scmp.ne.s32.totalorder %s142, %s143
      %p155 = scmp.eq.s32.totalorder %s39, 1
      %p156 = por %p154, %p155
      %p158 = scmp.ne.s32.totalorder %s143, %s157
      %p159 = scmp.eq.s32.totalorder %s39, 0
      %p160 = por %p158, %p159
      %s162 = sadd.s32 %s161, 1
      %p165 = scmp.eq.s32.totalorder %s33, 1
      %p166 = scmp.ne.s32.totalorder %s161, %s163
      %p167 = scmp.eq.s32.totalorder %s33, 0
      %p168 = por %p166, %p167
      %p169 = scmp.ne.s32.totalorder %s161, %s163
      %p170 = scmp.eq.s32.totalorder %s38, 1
      %p171 = por %p169, %p170
      %p172 = scmp.ne.s32.totalorder %s163, %s164
      %p173 = scmp.eq.s32.totalorder %s38, 0
      %p174 = por %p172, %p173
      %p175 = scmp.ne.s32.totalorder %s163, %s164
      %p176 = scmp.eq.s32.totalorder %s39, 1
      %p177 = por %p175, %p176
      %p179 = scmp.ne.s32.totalorder %s164, %s178
      %p180 = scmp.eq.s32.totalorder %s39, 0
      %p181 = por %p179, %p180
      %s183 = sadd.s32 %s182, 1
      %p186 = scmp.eq.s32.totalorder %s33, 1
      %p187 = scmp.ne.s32.totalorder %s182, %s184
      %p188 = scmp.eq.s32.totalorder %s33, 0
      %p189 = por %p187, %p188
      %p190 = scmp.ne.s32.totalorder %s182, %s184
      %p191 = scmp.eq.s32.totalorder %s38, 1
      %p192 = por %p190, %p191
      %p193 = scmp.ne.s32.totalorder %s184, %s185
      %p194 = scmp.eq.s32.totalorder %s38, 0
      %p195 = por %p193, %p194
      %p196 = scmp.ne.s32.totalorder %s184, %s185
      %p197 = scmp.eq.s32.totalorder %s39, 1
      %p198 = por %p196, %p197
      %p200 = scmp.ne.s32.totalorder %s185, %s199
      %p201 = scmp.eq.s32.totalorder %s39, 0
      %p202 = por %p200, %p201
      %s204 = sadd.s32 %s203, 1
      %p207 = scmp.eq.s32.totalorder %s33, 1
      %p208 = scmp.ne.s32.totalorder %s203, %s205
      %p209 = scmp.eq.s32.totalorder %s33, 0
      %p210 = por %p208, %p209
      %p211 = scmp.ne.s32.totalorder %s203, %s205
      %p212 = scmp.eq.s32.totalorder %s38, 1
      %p213 = por %p211, %p212
      %p214 = scmp.ne.s32.totalorder %s205, %s206
      %p215 = scmp.eq.s32.totalorder %s38, 0
      %p216 = por %p214, %p215
      %p217 = scmp.ne.s32.totalorder %s205, %s206
      %p218 = scmp.eq.s32.totalorder %s39, 1
      %p219 = por %p217, %p218
      %p221 = scmp.ne.s32.totalorder %s206, %s220
      %p222 = scmp.eq.s32.totalorder %s39, 0
      %p223 = por %p221, %p222
      %s225 = sadd.s32 %s224, 1
      %p228 = scmp.eq.s32.totalorder %s33, 1
      %p229 = scmp.ne.s32.totalorder %s224, %s226
      %p230 = scmp.eq.s32.totalorder %s33, 0
      %p231 = por %p229, %p230
      %p232 = scmp.ne.s32.totalorder %s224, %s226
      %p233 = scmp.eq.s32.totalorder %s38, 1
      %p234 = por %p232, %p233
      %p235 = scmp.ne.s32.totalorder %s226, %s227
      %p236 = scmp.eq.s32.totalorder %s38, 0
      %p237 = por %p235, %p236
      %p238 = scmp.ne.s32.totalorder %s226, %s227
      %p239 = scmp.eq.s32.totalorder %s39, 1
      %p240 = por %p238, %p239
      %p242 = scmp.ne.s32.totalorder %s227, %s241
      %p243 = scmp.eq.s32.totalorder %s39, 0
      %p244 = por %p242, %p243
      %s246 = sadd.s32 %s245, 1
      %p249 = scmp.eq.s32.totalorder %s33, 1
      %p250 = scmp.ne.s32.totalorder %s245, %s247
      %p251 = scmp.eq.s32.totalorder %s33, 0
      %p252 = por %p250, %p251
      %p253 = scmp.ne.s32.totalorder %s245, %s247
      %p254 = scmp.eq.s32.totalorder %s38, 1
      %p255 = por %p253, %p254
      %p256 = scmp.ne.s32.totalorder %s247, %s248
      %p257 = scmp.eq.s32.totalorder %s38, 0
      %p258 = por %p256, %p257
      %p259 = scmp.ne.s32.totalorder %s247, %s248
      %p260 = scmp.eq.s32.totalorder %s39, 1
      %p261 = por %p259, %p260
      %p263 = scmp.ne.s32.totalorder %s248, %s262
      %p264 = scmp.eq.s32.totalorder %s39, 0
      %p265 = por %p263, %p264
      %s267 = sadd.s32 %s266, 1
      %p270 = scmp.eq.s32.totalorder %s33, 1
      %p271 = scmp.ne.s32.totalorder %s266, %s268
      %p272 = scmp.eq.s32.totalorder %s33, 0
      %p273 = por %p271, %p272
      %p274 = scmp.ne.s32.totalorder %s266, %s268
      %p275 = scmp.eq.s32.totalorder %s38, 1
      %p276 = por %p274, %p275
      %p277 = scmp.ne.s32.totalorder %s268, %s269
      %p278 = scmp.eq.s32.totalorder %s38, 0
      %p279 = por %p277, %p278
      %p280 = scmp.ne.s32.totalorder %s268, %s269
      %p281 = scmp.eq.s32.totalorder %s39, 1
      %p282 = por %p280, %p281
      %p284 = scmp.ne.s32.totalorder %s269, %s283
      %p285 = scmp.eq.s32.totalorder %s39, 0
      %p286 = por %p284, %p285
      %s287 = ssub.s32 %s33, %s40
      %p288 = scmp.eq.s32.totalorder %s287, 0
      %s290 = sadd.s32 %s289, 1
      %s291 = scalar_select %p288, %s289, %s290
      %p294 = pneg %p288
      %p295 = scmp.eq.s32.totalorder %s33, 1
      %p296 = por %p294, %p295
      %p297 = scmp.ne.s32.totalorder %s289, %s292
      %p298 = scmp.eq.s32.totalorder %s33, 0
      %p299 = por %p297, %p298
      %p300 = scmp.ne.s32.totalorder %s289, %s292
      %p301 = scmp.eq.s32.totalorder %s38, 1
      %p302 = por %p300, %p301
      %p303 = scmp.ne.s32.totalorder %s292, %s293
      %p304 = scmp.eq.s32.totalorder %s38, 0
      %p305 = por %p303, %p304
      %p306 = scmp.ne.s32.totalorder %s292, %s293
      %p307 = scmp.eq.s32.totalorder %s39, 1
      %p308 = por %p306, %p307
      %p310 = scmp.ne.s32.totalorder %s293, %s309
      %p311 = scmp.eq.s32.totalorder %s39, 0
      %p312 = por %p310, %p311
      %s313 = ssub.s32 %s33, %s40
      %p314 = scmp.eq.s32.totalorder %s313, 0
      %s316 = sadd.s32 %s315, 1
      %s317 = scalar_select %p314, %s315, %s316
      %p320 = pneg %p314
      %p321 = scmp.eq.s32.totalorder %s33, 1
      %p322 = por %p320, %p321
      %p323 = scmp.ne.s32.totalorder %s315, %s318
      %p324 = scmp.eq.s32.totalorder %s33, 0
      %p325 = por %p323, %p324
      %p326 = scmp.ne.s32.totalorder %s315, %s318
      %p327 = scmp.eq.s32.totalorder %s38, 1
      %p328 = por %p326, %p327
      %p329 = scmp.ne.s32.totalorder %s318, %s319
      %p330 = scmp.eq.s32.totalorder %s38, 0
      %p331 = por %p329, %p330
      %p332 = scmp.ne.s32.totalorder %s318, %s319
      %p333 = scmp.eq.s32.totalorder %s39, 1
      %p334 = por %p332, %p333
      %p336 = scmp.ne.s32.totalorder %s319, %s335
      %p337 = scmp.eq.s32.totalorder %s39, 0
      %p338 = por %p336, %p337
      %p339 = scmp.le.s32.totalorder 1, %s33
      %p340 = scmp.lt.s32.totalorder %s33, 3
      %p341 = pnand %p339, %p340
      %p342 = pneg %p341
      // Predicated region
      $region9: #{tpu_custom_call.1} parent=5 // pred_check
        _
      $region10: #{tpu_custom_call.1} parent=5 // pred_check_branch
        %344 = sbr.rel (%p341) target = $region12
      $region11: #{tpu_custom_call.1} parent=5 // pred_region
        %s345 = ssub.s32 %s33, 1
        // Predicated region
        $region13: #{tpu_custom_call.1} parent=11 // pred_check
          %p346 = pneg %p132
        $region14: #{tpu_custom_call.1} parent=11 // pred_check_branch
          %348 = sbr.rel (%p346) target = $region16
        $region15: #{tpu_custom_call.1} parent=11 // pred_region
          %s350 = ssub.s32 1024, 1024
          %351 = vsyncadd [#allocation9], %s350
          %s352 = sshll.u32 [#allocation8], 4
          %s353 = int_to_ptr.vmem [resolvable:$true] %s352
          %358 = dma.hbm_to_vmem [thread:$0]  %s3, 1024, %s353, [#allocation9], 64, 64, 4
        $region16: #{tpu_custom_call.1} parent=11 // pred_fallthru
          _
        // Predicated region
        $region17: #{tpu_custom_call.1} parent=11 // pred_check
          %p359 = pneg %p153
        $region18: #{tpu_custom_call.1} parent=11 // pred_check_branch
          %361 = sbr.rel (%p359) target = $region20
        $region19: #{tpu_custom_call.1} parent=11 // pred_region
          _
        $region20: #{tpu_custom_call.1} parent=11 // pred_fallthru
          _
        // Predicated region
        $region21: #{tpu_custom_call.1} parent=11 // pred_check
          %p362 = pneg %p174
        $region22: #{tpu_custom_call.1} parent=11 // pred_check_branch
          %364 = sbr.rel (%p362) target = $region24
        $region23: #{tpu_custom_call.1} parent=11 // pred_region
          %s366 = ssub.s32 1024, 1024
          %367 = vsyncadd [#allocation9], %s366
          %s368 = sshll.u32 [#allocation10], 4
          %s369 = int_to_ptr.vmem [resolvable:$true] %s368
          %374 = dma.hbm_to_vmem [thread:$0]  %s5, 1024, %s369, [#allocation9], 64, 64, 4
        $region24: #{tpu_custom_call.1} parent=11 // pred_fallthru
          _
        // Predicated region
        $region25: #{tpu_custom_call.1} parent=11 // pred_check
          %p375 = pneg %p195
        $region26: #{tpu_custom_call.1} parent=11 // pred_check_branch
          %377 = sbr.rel (%p375) target = $region28
        $region27: #{tpu_custom_call.1} parent=11 // pred_region
          _
        $region28: #{tpu_custom_call.1} parent=11 // pred_fallthru
          _
        // Predicated region
        $region29: #{tpu_custom_call.1} parent=11 // pred_check
          %p378 = pneg %p216
        $region30: #{tpu_custom_call.1} parent=11 // pred_check_branch
          %380 = sbr.rel (%p378) target = $region32
        $region31: #{tpu_custom_call.1} parent=11 // pred_region
          %s382 = ssub.s32 1024, 1024
          %383 = vsyncadd [#allocation12], %s382
          %s384 = sshll.u32 [#allocation11], 4
          %s385 = int_to_ptr.vmem [resolvable:$true] %s384
          %390 = dma.hbm_to_vmem [thread:$0]  %s7, 1024, %s385, [#allocation12], 64, 64, 4
        $region32: #{tpu_custom_call.1} parent=11 // pred_fallthru
          _
        // Predicated region
        $region33: #{tpu_custom_call.1} parent=11 // pred_check
          %p391 = pneg %p237
        $region34: #{tpu_custom_call.1} parent=11 // pred_check_branch
          %393 = sbr.rel (%p391) target = $region36
        $region35: #{tpu_custom_call.1} parent=11 // pred_region
          _
        $region36: #{tpu_custom_call.1} parent=11 // pred_fallthru
          _
        // Predicated region
        $region37: #{tpu_custom_call.1} parent=11 // pred_check
          %p394 = pneg %p258
        $region38: #{tpu_custom_call.1} parent=11 // pred_check_branch
          %396 = sbr.rel (%p394) target = $region40
        $region39: #{tpu_custom_call.1} parent=11 // pred_region
          %s398 = ssub.s32 1024, 1024
          %399 = vsyncadd [#allocation12], %s398
          %s400 = sshll.u32 [#allocation13], 4
          %s401 = int_to_ptr.vmem [resolvable:$true] %s400
          %406 = dma.hbm_to_vmem [thread:$0]  %s9, 1024, %s401, [#allocation12], 64, 64, 4
        $region40: #{tpu_custom_call.1} parent=11 // pred_fallthru
          _
        // Predicated region
        $region41: #{tpu_custom_call.1} parent=11 // pred_check
          %p407 = pneg %p279
        $region42: #{tpu_custom_call.1} parent=11 // pred_check_branch
          %409 = sbr.rel (%p407) target = $region44
        $region43: #{tpu_custom_call.1} parent=11 // pred_region
          _
        $region44: #{tpu_custom_call.1} parent=11 // pred_fallthru
          _
      $region12: #{tpu_custom_call.1} parent=5 // pred_fallthru
        _
      %p410 = scmp.lt.s32.totalorder %s33, 2
      // Predicated region
      $region45: #{tpu_custom_call.1} parent=5 // pred_check
        %p411 = pneg %p410
      $region46: #{tpu_custom_call.1} parent=5 // pred_check_branch
        %413 = sbr.rel (%p411) target = $region48
      $region47: #{tpu_custom_call.1} parent=5 // pred_region
        // Predicated region
        $region49: #{tpu_custom_call.1} parent=47 // pred_check
          %p414 = pneg %p53
        $region50: #{tpu_custom_call.1} parent=47 // pred_check_branch
          %416 = sbr.rel (%p414) target = $region52
        $region51: #{tpu_custom_call.1} parent=47 // pred_region
          %s417 = sand.u32 %s43, 1
          %s418 = scalar_lea.sflag [#allocation3], %s417
          %s419 = sand.u32 %s43, 1
          %s420 = smul.addr %s419, 16
          %s421 = scalar_lea.vmem [#allocation2], %s420
          %s422 = smul.u32 4, %s33
          %s424 = ssub.s32 256, 256
          %425 = vsyncadd %s418, %s424
          %s426 = smul.addr %s422, 64
          %s427 = scalar_lea.hbm %s0, %s426
          %s428 = sshll.u32 %s421, 4
          %s429 = int_to_ptr.vmem [resolvable:$true] %s428
          %434 = dma.hbm_to_vmem [thread:$0]  %s427, 256, %s429, %s418, 64, 64, 4
        $region52: #{tpu_custom_call.1} parent=47 // pred_fallthru
          _
        // Predicated region
        $region53: #{tpu_custom_call.1} parent=47 // pred_check
          %p435 = pneg %p79
        $region54: #{tpu_custom_call.1} parent=47 // pred_check_branch
          %437 = sbr.rel (%p435) target = $region56
        $region55: #{tpu_custom_call.1} parent=47 // pred_region
          %s438 = sand.u32 %s33, 1
          %s439 = scalar_lea.sflag [#allocation6], %s438
          %s440 = sand.u32 %s69, 1
          %s441 = smul.addr %s440, 128
          %s442 = scalar_lea.vmem [#allocation5], %s441
          %s443 = smul.u32 32, %s33
          %s445 = ssub.s32 2048, 2048
          %446 = vsyncadd %s439, %s445
          %s447 = smul.addr %s443, 64
          %s448 = scalar_lea.hbm %s1, %s447
          %s449 = sshll.u32 %s442, 4
          %s450 = int_to_ptr.vmem [resolvable:$true] %s449
          %455 = dma.hbm_to_vmem [thread:$0]  %s448, 2048, %s450, %s439, 64, 64, 4
        $region56: #{tpu_custom_call.1} parent=47 // pred_fallthru
          _
        // Predicated region
        $region57: #{tpu_custom_call.1} parent=47 // pred_check
          %p456 = pneg %p105
        $region58: #{tpu_custom_call.1} parent=47 // pred_check_branch
          %458 = sbr.rel (%p456) target = $region60
        $region59: #{tpu_custom_call.1} parent=47 // pred_region
          %s459 = sand.u32 %s33, 1
          %s460 = scalar_lea.sflag [#allocation6], %s459
          %s461 = sand.u32 %s95, 1
          %s462 = smul.addr %s461, 128
          %s463 = scalar_lea.vmem [#allocation7], %s462
          %s464 = smul.u32 32, %s33
          %s466 = ssub.s32 2048, 2048
          %467 = vsyncadd %s460, %s466
          %s468 = smul.addr %s464, 64
          %s469 = scalar_lea.hbm %s2, %s468
          %s470 = sshll.u32 %s463, 4
          %s471 = int_to_ptr.vmem [resolvable:$true] %s470
          %476 = dma.hbm_to_vmem [thread:$0]  %s469, 2048, %s471, %s460, 64, 64, 4
        $region60: #{tpu_custom_call.1} parent=47 // pred_fallthru
          _
      $region48: #{tpu_custom_call.1} parent=5 // pred_fallthru
        _
      %p477 = scmp.le.s32.totalorder 1, %s33
      %p478 = scmp.lt.s32.totalorder %s33, 3
      %p479 = pnand %p477, %p478
      %p480 = pneg %p479
      // Predicated region
      $region61: #{tpu_custom_call.1} parent=5 // pred_check
        _
      $region62: #{tpu_custom_call.1} parent=5 // pred_check_branch
        %482 = sbr.rel (%p479) target = $region64
      $region63: #{tpu_custom_call.1} parent=5 // pred_region
        %s483 = ssub.s32 %s33, 1
        %s484 = sand.u32 %s46, 1
        %s485 = scalar_lea.sflag [#allocation3], %s484
        %s486 = sand.u32 %s46, 1
        %s487 = smul.addr %s486, 16
        %s488 = scalar_lea.vmem [#allocation2], %s487
        // Predicated region
        $region65: #{tpu_custom_call.1} parent=63 // pred_check
          %p489 = pneg %p59
        $region66: #{tpu_custom_call.1} parent=63 // pred_check_branch
          %491 = sbr.rel (%p489) target = $region68
        $region67: #{tpu_custom_call.1} parent=63 // pred_region
          %492 = dma.done %s485, 256
        $region68: #{tpu_custom_call.1} parent=63 // pred_fallthru
          _
        %s493 = sand.u32 %s38, 1
        %s494 = scalar_lea.sflag [#allocation6], %s493
        %s495 = sand.u32 %s72, 1
        %s496 = smul.addr %s495, 128
        %s497 = scalar_lea.vmem [#allocation5], %s496
        // Predicated region
        $region69: #{tpu_custom_call.1} parent=63 // pred_check
          %p498 = pneg %p85
        $region70: #{tpu_custom_call.1} parent=63 // pred_check_branch
          %500 = sbr.rel (%p498) target = $region72
        $region71: #{tpu_custom_call.1} parent=63 // pred_region
          %501 = dma.done %s494, 2048
        $region72: #{tpu_custom_call.1} parent=63 // pred_fallthru
          _
        %s502 = sand.u32 %s38, 1
        %s503 = scalar_lea.sflag [#allocation6], %s502
        %s504 = sand.u32 %s98, 1
        %s505 = smul.addr %s504, 128
        %s506 = scalar_lea.vmem [#allocation7], %s505
        // Predicated region
        $region73: #{tpu_custom_call.1} parent=63 // pred_check
          %p507 = pneg %p111
        $region74: #{tpu_custom_call.1} parent=63 // pred_check_branch
          %509 = sbr.rel (%p507) target = $region76
        $region75: #{tpu_custom_call.1} parent=63 // pred_region
          %510 = dma.done %s503, 2048
        $region76: #{tpu_custom_call.1} parent=63 // pred_fallthru
          _
        // Predicated region
        $region77: #{tpu_custom_call.1} parent=63 // pred_check
          %p511 = pneg %p132
        $region78: #{tpu_custom_call.1} parent=63 // pred_check_branch
          %513 = sbr.rel (%p511) target = $region80
        $region79: #{tpu_custom_call.1} parent=63 // pred_region
          %514 = dma.done [#allocation9], 1024
        $region80: #{tpu_custom_call.1} parent=63 // pred_fallthru
          _
        // Predicated region
        $region81: #{tpu_custom_call.1} parent=63 // pred_check
          %p515 = pneg %p174
        $region82: #{tpu_custom_call.1} parent=63 // pred_check_branch
          %517 = sbr.rel (%p515) target = $region84
        $region83: #{tpu_custom_call.1} parent=63 // pred_region
          %518 = dma.done [#allocation9], 1024
        $region84: #{tpu_custom_call.1} parent=63 // pred_fallthru
          _
        // Predicated region
        $region85: #{tpu_custom_call.1} parent=63 // pred_check
          %p519 = pneg %p216
        $region86: #{tpu_custom_call.1} parent=63 // pred_check_branch
          %521 = sbr.rel (%p519) target = $region88
        $region87: #{tpu_custom_call.1} parent=63 // pred_region
          %522 = dma.done [#allocation12], 1024
        $region88: #{tpu_custom_call.1} parent=63 // pred_fallthru
          _
        // Predicated region
        $region89: #{tpu_custom_call.1} parent=63 // pred_check
          %p523 = pneg %p258
        $region90: #{tpu_custom_call.1} parent=63 // pred_check_branch
          %525 = sbr.rel (%p523) target = $region92
        $region91: #{tpu_custom_call.1} parent=63 // pred_region
          %526 = dma.done [#allocation12], 1024
        $region92: #{tpu_custom_call.1} parent=63 // pred_fallthru
          _
        %s527 = sand.u32 %s46, 1
        %s528 = scalar_lea.sflag [#allocation3], %s527
        %s529 = sand.u32 %s46, 1
        %s530 = smul.addr %s529, 16
        %s531 = scalar_lea.vmem [#allocation2], %s530
        %p532 = pneg %p59
        %p533 = pneg %p56
        %s534 = sand.u32 %s38, 1
        %s535 = scalar_lea.sflag [#allocation6], %s534
        %s536 = sand.u32 %s72, 1
        %s537 = smul.addr %s536, 128
        %s538 = scalar_lea.vmem [#allocation5], %s537
        %p539 = pneg %p85
        %p540 = pneg %p82
        %s541 = sand.u32 %s38, 1
        %s542 = scalar_lea.sflag [#allocation6], %s541
        %s543 = sand.u32 %s98, 1
        %s544 = smul.addr %s543, 128
        %s545 = scalar_lea.vmem [#allocation7], %s544
        %p546 = pneg %p111
        %p547 = pneg %p108
        %p548 = pneg %p132
        %p549 = pneg %p129
        %p550 = pneg %p153
        %p551 = pneg %p150
        %p552 = pneg %p174
        %p553 = pneg %p171
        %p554 = pneg %p195
        %p555 = pneg %p192
        %p556 = pneg %p216
        %p557 = pneg %p213
        %p558 = pneg %p237
        %p559 = pneg %p234
        %p560 = pneg %p258
        %p561 = pneg %p255
        %p562 = pneg %p279
        %p563 = pneg %p276
        %p564 = pneg %p305
        %p565 = pneg %p302
        %s566 = sand.u32 %s292, 1
        %s567 = scalar_lea.sflag [#allocation4], %s566
        %s568 = sand.u32 %s292, 1
        %s569 = smul.addr %s568, 32
        %s570 = scalar_lea.vmem [#allocation14], %s569
        %p571 = pneg %p331
        %p572 = pneg %p328
        %s573 = sand.u32 %s318, 1
        %s574 = scalar_lea.sflag [#allocation16], %s573
        %s575 = sand.u32 %s318, 1
        %s576 = smul.addr %s575, 32
        %s577 = scalar_lea.vmem [#allocation15], %s576
        %s578 = smul.u32 4, %s38
        %s579 = smul.u32 32, %s38
        %s580 = smul.u32 32, %s38
        %s581 = smul.u32 4, %s38
        %s582 = smul.u32 4, %s38
        %v584 = vld [vmem:[%s488] sm:$0xf]
        %v585 = vld [vmem:[%s488 + $0x4] sm:$0xf]
        %v586 = vld [vmem:[%s488 + $0x8] sm:$0xf]
        %v587 = vld [vmem:[%s488 + $0xc] sm:$0xf]
        %v588 = vld [vmem:[#allocation8] sm:$0xf]
        %v589 = vld [vmem:[#allocation8 + $0x4] sm:$0xf]
        %v590 = vld [vmem:[#allocation8 + $0x8] sm:$0xf]
        %v591 = vld [vmem:[#allocation8 + $0xc] sm:$0xf]
        %v592 = vld [vmem:[#allocation8 + $0x10] sm:$0xf]
        %v593 = vld [vmem:[#allocation8 + $0x14] sm:$0xf]
        %v594 = vld [vmem:[#allocation8 + $0x18] sm:$0xf]
        %v595 = vld [vmem:[#allocation8 + $0x1c] sm:$0xf]
        %v596 = vld [vmem:[#allocation8 + $0x20] sm:$0xf]
        %v597 = vld [vmem:[#allocation8 + $0x24] sm:$0xf]
        %v598 = vld [vmem:[#allocation8 + $0x28] sm:$0xf]
        %v599 = vld [vmem:[#allocation8 + $0x2c] sm:$0xf]
        %v600 = vld [vmem:[#allocation8 + $0x30] sm:$0xf]
        %v601 = vld [vmem:[#allocation8 + $0x34] sm:$0xf]
        %v602 = vld [vmem:[#allocation8 + $0x38] sm:$0xf]
        %v603 = vld [vmem:[#allocation8 + $0x3c] sm:$0xf]
        %v604 = vld [vmem:[%s4] sm:$0x1]
        %v606 = vlaneseq
        %v607 = vshrl.u32 %v606, 7
        %v608 = vsub.s32 0, %v607
        %v609 = vrot.slane %v604, %v608
        %v615 = vunpack.c.l.b16 %v584
        %v616 = vunpack.c.l.b16 %v585
        %v617 = vunpack.c.l.b16 %v586
        %v618 = vunpack.c.l.b16 %v587
        %v619 = vpack.c.b16 %v616, %v615
        %v620 = vpack.c.b16 %v618, %v617
        %v639 = vunpack.c.l.b16 %v588
        %v640 = vunpack.c.l.b16 %v589
        %v641 = vunpack.c.l.b16 %v590
        %v642 = vunpack.c.l.b16 %v591
        %v643 = vunpack.c.l.b16 %v592
        %v644 = vunpack.c.l.b16 %v593
        %v645 = vunpack.c.l.b16 %v594
        %v646 = vunpack.c.l.b16 %v595
        %v647 = vunpack.c.l.b16 %v596
        %v648 = vunpack.c.l.b16 %v597
        %v649 = vunpack.c.l.b16 %v598
        %v650 = vunpack.c.l.b16 %v599
        %v651 = vunpack.c.l.b16 %v600
        %v652 = vunpack.c.l.b16 %v601
        %v653 = vunpack.c.l.b16 %v602
        %v654 = vunpack.c.l.b16 %v603
        %v655 = vpack.c.b16 %v640, %v639
        %v656 = vpack.c.b16 %v642, %v641
        %v657 = vpack.c.b16 %v644, %v643
        %v658 = vpack.c.b16 %v646, %v645
        %v659 = vpack.c.b16 %v648, %v647
        %v660 = vpack.c.b16 %v650, %v649
        %v661 = vpack.c.b16 %v652, %v651
        %v662 = vpack.c.b16 %v654, %v653
        %671 = vmatprep.subr.bf16.mxu0 0
        %672 = vmatpush1.bf16.msra.mxu0 %v655
        %673 = vmatprep.subr.bf16.mxu0 0
        %674 = vmatpush1.bf16.msra.mxu0 %v656
        %675 = vmatprep.subr.bf16.mxu0 0
        %676 = vmatpush1.bf16.msra.mxu0 %v657
        %677 = vmatprep.subr.bf16.mxu0 0
        %678 = vmatpush1.bf16.msra.mxu0 %v658
        %679 = vmatprep.subr.bf16.mxu0 0
        %680 = vmatpush1.bf16.msra.mxu0 %v659
        %681 = vmatprep.subr.bf16.mxu0 0
        %682 = vmatpush1.bf16.msra.mxu0 %v660
        %683 = vmatprep.subr.bf16.mxu0 0
        %684 = vmatpush1.bf16.msra.mxu0 %v661
        %685 = vmatprep.subr.bf16.mxu0 0
        %686 = vmatpush1.bf16.msra.mxu0 %v662
        %687 = vmatprep.subr.bf16.mxu0 0
        %688 = vmatpush1.bf16.msra.mxu0 0
        %689 = vmatprep.subr.bf16.mxu0 0
        %690 = vmatpush1.bf16.msra.mxu0 0
        %691 = vmatprep.subr.bf16.mxu0 0
        %692 = vmatpush1.bf16.msra.mxu0 0
        %693 = vmatprep.subr.bf16.mxu0 0
        %694 = vmatpush1.bf16.msra.mxu0 0
        %695 = vmatprep.subr.bf16.mxu0 0
        %696 = vmatpush1.bf16.msra.mxu0 0
        %697 = vmatprep.subr.bf16.mxu0 0
        %698 = vmatpush1.bf16.msra.mxu0 0
        %699 = vmatprep.subr.bf16.mxu0 0
        %700 = vmatpush1.bf16.msra.mxu0 0
        %701 = vmatprep.subr.bf16.mxu0 0
        %702 = vmatpush1.bf16.msra.mxu0 0
        %703 = vmatprep.mubr.bf16.mxu0 0
        %704 = vmatmul.mubr.bf16.gmra.mrb[0].mxu0 %v619
        %v705 = vpop.f32.mrb[0].mxu0
        %v706 = vadd.f32 %v609, %v705
        %v707 = vpop.f32.mrb[0].mxu0
        %v708 = vpop.f32.mrb[0].mxu0
        %v709 = vadd.f32 %v609, %v708
        %v710 = vpop.f32.mrb[0].mxu0
        %711 = vmatprep.mubr.bf16.mxu0 0
        %712 = vmatmul.mubr.bf16.gmra.mrb[0].mxu0 %v620
        %v713 = vpop.f32.mrb[0].mxu0
        %v714 = vadd.f32 %v609, %v713
        %v715 = vpop.f32.mrb[0].mxu0
        %v716 = vpop.f32.mrb[0].mxu0
        %v717 = vadd.f32 %v609, %v716
        %v718 = vpop.f32.mrb[0].mxu0
        %719 = vdwg.mxu0
        %v720 = vld [vmem:[%s497] sm:$0xf]
        %v721 = vld [vmem:[%s497 + $0x4] sm:$0xf]
        %v722 = vld [vmem:[%s497 + $0x8] sm:$0xf]
        %v723 = vld [vmem:[%s497 + $0xc] sm:$0xf]
        %v724 = vld [vmem:[%s497 + $0x10] sm:$0xf]
        %v725 = vld [vmem:[%s497 + $0x14] sm:$0xf]
        %v726 = vld [vmem:[%s497 + $0x18] sm:$0xf]
        %v727 = vld [vmem:[%s497 + $0x1c] sm:$0xf]
        %v728 = vld [vmem:[%s497 + $0x20] sm:$0xf]
        %v729 = vld [vmem:[%s497 + $0x24] sm:$0xf]
        %v730 = vld [vmem:[%s497 + $0x28] sm:$0xf]
        %v731 = vld [vmem:[%s497 + $0x2c] sm:$0xf]
        %v732 = vld [vmem:[%s497 + $0x30] sm:$0xf]
        %v733 = vld [vmem:[%s497 + $0x34] sm:$0xf]
        %v734 = vld [vmem:[%s497 + $0x38] sm:$0xf]
        %v735 = vld [vmem:[%s497 + $0x3c] sm:$0xf]
        %v736 = vld [vmem:[%s497 + $0x40] sm:$0xf]
        %v737 = vld [vmem:[%s497 + $0x44] sm:$0xf]
        %v738 = vld [vmem:[%s497 + $0x48] sm:$0xf]
        %v739 = vld [vmem:[%s497 + $0x4c] sm:$0xf]
        %v740 = vld [vmem:[%s497 + $0x50] sm:$0xf]
        %v741 = vld [vmem:[%s497 + $0x54] sm:$0xf]
        %v742 = vld [vmem:[%s497 + $0x58] sm:$0xf]
        %v743 = vld [vmem:[%s497 + $0x5c] sm:$0xf]
        %v744 = vld [vmem:[%s497 + $0x60] sm:$0xf]
        %v745 = vld [vmem:[%s497 + $0x64] sm:$0xf]
        %v746 = vld [vmem:[%s497 + $0x68] sm:$0xf]
        %v747 = vld [vmem:[%s497 + $0x6c] sm:$0xf]
        %v748 = vld [vmem:[%s497 + $0x70] sm:$0xf]
        %v749 = vld [vmem:[%s497 + $0x74] sm:$0xf]
        %v750 = vld [vmem:[%s497 + $0x78] sm:$0xf]
        %v751 = vld [vmem:[%s497 + $0x7c] sm:$0xf]
        %v752 = vld [vmem:[#allocation10] sm:$0xf]
        %v753 = vld [vmem:[#allocation10 + $0x4] sm:$0xf]
        %v754 = vld [vmem:[#allocation10 + $0x8] sm:$0xf]
        %v755 = vld [vmem:[#allocation10 + $0xc] sm:$0xf]
        %v756 = vld [vmem:[#allocation10 + $0x10] sm:$0xf]
        %v757 = vld [vmem:[#allocation10 + $0x14] sm:$0xf]
        %v758 = vld [vmem:[#allocation10 + $0x18] sm:$0xf]
        %v759 = vld [vmem:[#allocation10 + $0x1c] sm:$0xf]
        %v760 = vld [vmem:[#allocation10 + $0x20] sm:$0xf]
        %v761 = vld [vmem:[#allocation10 + $0x24] sm:$0xf]
        %v762 = vld [vmem:[#allocation10 + $0x28] sm:$0xf]
        %v763 = vld [vmem:[#allocation10 + $0x2c] sm:$0xf]
        %v764 = vld [vmem:[#allocation10 + $0x30] sm:$0xf]
        %v765 = vld [vmem:[#allocation10 + $0x34] sm:$0xf]
        %v766 = vld [vmem:[#allocation10 + $0x38] sm:$0xf]
        %v767 = vld [vmem:[#allocation10 + $0x3c] sm:$0xf]
        %v768 = vld [vmem:[%s6] sm:$0x1]
        %v770 = vlaneseq
        %v771 = vshrl.u32 %v770, 7
        %v772 = vsub.s32 0, %v771
        %v773 = vrot.slane %v768, %v772
        %v807 = vunpack.c.l.b16 %v720
        %v808 = vunpack.c.l.b16 %v721
        %v809 = vunpack.c.l.b16 %v722
        %v810 = vunpack.c.l.b16 %v723
        %v811 = vunpack.c.l.b16 %v724
        %v812 = vunpack.c.l.b16 %v725
        %v813 = vunpack.c.l.b16 %v726
        %v814 = vunpack.c.l.b16 %v727
        %v815 = vunpack.c.l.b16 %v728
        %v816 = vunpack.c.l.b16 %v729
        %v817 = vunpack.c.l.b16 %v730
        %v818 = vunpack.c.l.b16 %v731
        %v819 = vunpack.c.l.b16 %v732
        %v820 = vunpack.c.l.b16 %v733
        %v821 = vunpack.c.l.b16 %v734
        %v822 = vunpack.c.l.b16 %v735
        %v823 = vunpack.c.l.b16 %v736
        %v824 = vunpack.c.l.b16 %v737
        %v825 = vunpack.c.l.b16 %v738
        %v826 = vunpack.c.l.b16 %v739
        %v827 = vunpack.c.l.b16 %v740
        %v828 = vunpack.c.l.b16 %v741
        %v829 = vunpack.c.l.b16 %v742
        %v830 = vunpack.c.l.b16 %v743
        %v831 = vunpack.c.l.b16 %v744
        %v832 = vunpack.c.l.b16 %v745
        %v833 = vunpack.c.l.b16 %v746
        %v834 = vunpack.c.l.b16 %v747
        %v835 = vunpack.c.l.b16 %v748
        %v836 = vunpack.c.l.b16 %v749
        %v837 = vunpack.c.l.b16 %v750
        %v838 = vunpack.c.l.b16 %v751
        %v839 = vpack.c.b16 %v808, %v807
        %v840 = vpack.c.b16 %v810, %v809
        %v841 = vpack.c.b16 %v812, %v811
        %v842 = vpack.c.b16 %v814, %v813
        %v843 = vpack.c.b16 %v816, %v815
        %v844 = vpack.c.b16 %v818, %v817
        %v845 = vpack.c.b16 %v820, %v819
        %v846 = vpack.c.b16 %v822, %v821
        %v847 = vpack.c.b16 %v824, %v823
        %v848 = vpack.c.b16 %v826, %v825
        %v849 = vpack.c.b16 %v828, %v827
        %v850 = vpack.c.b16 %v830, %v829
        %v851 = vpack.c.b16 %v832, %v831
        %v852 = vpack.c.b16 %v834, %v833
        %v853 = vpack.c.b16 %v836, %v835
        %v854 = vpack.c.b16 %v838, %v837
        %v887 = vunpack.c.l.b16 %v752
        %v888 = vunpack.c.l.b16 %v753
        %v889 = vunpack.c.l.b16 %v754
        %v890 = vunpack.c.l.b16 %v755
        %v891 = vunpack.c.l.b16 %v756
        %v892 = vunpack.c.l.b16 %v757
        %v893 = vunpack.c.l.b16 %v758
        %v894 = vunpack.c.l.b16 %v759
        %v895 = vunpack.c.l.b16 %v760
        %v896 = vunpack.c.l.b16 %v761
        %v897 = vunpack.c.l.b16 %v762
        %v898 = vunpack.c.l.b16 %v763
        %v899 = vunpack.c.l.b16 %v764
        %v900 = vunpack.c.l.b16 %v765
        %v901 = vunpack.c.l.b16 %v766
        %v902 = vunpack.c.l.b16 %v767
        %v903 = vpack.c.b16 %v888, %v887
        %v904 = vpack.c.b16 %v890, %v889
        %v905 = vpack.c.b16 %v892, %v891
        %v906 = vpack.c.b16 %v894, %v893
        %v907 = vpack.c.b16 %v896, %v895
        %v908 = vpack.c.b16 %v898, %v897
        %v909 = vpack.c.b16 %v900, %v899
        %v910 = vpack.c.b16 %v902, %v901
        %919 = vmatprep.subr.bf16.mxu0 0
        %920 = vmatpush1.bf16.msra.mxu0 %v903
        %921 = vmatprep.subr.bf16.mxu0 0
        %922 = vmatpush1.bf16.msra.mxu0 %v904
        %923 = vmatprep.subr.bf16.mxu0 0
        %924 = vmatpush1.bf16.msra.mxu0 %v905
        %925 = vmatprep.subr.bf16.mxu0 0
        %926 = vmatpush1.bf16.msra.mxu0 %v906
        %927 = vmatprep.subr.bf16.mxu0 0
        %928 = vmatpush1.bf16.msra.mxu0 %v907
        %929 = vmatprep.subr.bf16.mxu0 0
        %930 = vmatpush1.bf16.msra.mxu0 %v908
        %931 = vmatprep.subr.bf16.mxu0 0
        %932 = vmatpush1.bf16.msra.mxu0 %v909
        %933 = vmatprep.subr.bf16.mxu0 0
        %934 = vmatpush1.bf16.msra.mxu0 %v910
        %935 = vmatprep.subr.bf16.mxu0 0
        %936 = vmatpush1.bf16.msra.mxu0 0
        %937 = vmatprep.subr.bf16.mxu0 0
        %938 = vmatpush1.bf16.msra.mxu0 0
        %939 = vmatprep.subr.bf16.mxu0 0
        %940 = vmatpush1.bf16.msra.mxu0 0
        %941 = vmatprep.subr.bf16.mxu0 0
        %942 = vmatpush1.bf16.msra.mxu0 0
        %943 = vmatprep.subr.bf16.mxu0 0
        %944 = vmatpush1.bf16.msra.mxu0 0
        %945 = vmatprep.subr.bf16.mxu0 0
        %946 = vmatpush1.bf16.msra.mxu0 0
        %947 = vmatprep.subr.bf16.mxu0 0
        %948 = vmatpush1.bf16.msra.mxu0 0
        %949 = vmatprep.subr.bf16.mxu0 0
        %950 = vmatpush1.bf16.msra.mxu0 0
        %951 = vmatprep.mubr.bf16.mxu0 0
        %952 = vmatmul.mubr.bf16.gmra.mrb[0].mxu0 %v839
        %v953 = vpop.f32.mrb[0].mxu0
        %v954 = vadd.f32 %v773, %v953
        %v955 = vpop.f32.mrb[0].mxu0
        %v956 = vpop.f32.mrb[0].mxu0
        %v957 = vadd.f32 %v773, %v956
        %v958 = vpop.f32.mrb[0].mxu0
        %959 = vmatprep.mubr.bf16.mxu0 0
        %960 = vmatmul.mubr.bf16.gmra.mrb[0].mxu0 %v840
        %v961 = vpop.f32.mrb[0].mxu0
        %v962 = vadd.f32 %v773, %v961
        %v963 = vpop.f32.mrb[0].mxu0
        %v964 = vpop.f32.mrb[0].mxu0
        %v965 = vadd.f32 %v773, %v964
        %v966 = vpop.f32.mrb[0].mxu0
        %967 = vmatprep.mubr.bf16.mxu0 0
        %968 = vmatmul.mubr.bf16.gmra.mrb[0].mxu0 %v841
        %v969 = vpop.f32.mrb[0].mxu0
        %v970 = vadd.f32 %v773, %v969
        %v971 = vpop.f32.mrb[0].mxu0
        %v972 = vpop.f32.mrb[0].mxu0
        %v973 = vadd.f32 %v773, %v972
        %v974 = vpop.f32.mrb[0].mxu0
        %975 = vmatprep.mubr.bf16.mxu0 0
        %976 = vmatmul.mubr.bf16.gmra.mrb[0].mxu0 %v842
        %v977 = vpop.f32.mrb[0].mxu0
        %v978 = vadd.f32 %v773, %v977
        %v979 = vpop.f32.mrb[0].mxu0
        %v980 = vpop.f32.mrb[0].mxu0
        %v981 = vadd.f32 %v773, %v980
        %v982 = vpop.f32.mrb[0].mxu0
        %983 = vmatprep.mubr.bf16.mxu0 0
        %984 = vmatmul.mubr.bf16.gmra.mrb[0].mxu0 %v843
        %v985 = vpop.f32.mrb[0].mxu0
        %v986 = vadd.f32 %v773, %v985
        %v987 = vpop.f32.mrb[0].mxu0
        %v988 = vpop.f32.mrb[0].mxu0
        %v989 = vadd.f32 %v773, %v988
        %v990 = vpop.f32.mrb[0].mxu0
        %991 = vmatprep.mubr.bf16.mxu0 0
        %992 = vmatmul.mubr.bf16.gmra.mrb[0].mxu0 %v844
        %v993 = vpop.f32.mrb[0].mxu0
        %v994 = vadd.f32 %v773, %v993
        %v995 = vpop.f32.mrb[0].mxu0
        %v996 = vpop.f32.mrb[0].mxu0
        %v997 = vadd.f32 %v773, %v996
        %v998 = vpop.f32.mrb[0].mxu0
        %999 = vmatprep.mubr.bf16.mxu0 0
        %1000 = vmatmul.mubr.bf16.gmra.mrb[0].mxu0 %v845
        %v1001 = vpop.f32.mrb[0].mxu0
        %v1002 = vadd.f32 %v773, %v1001
        %v1003 = vpop.f32.mrb[0].mxu0
        %v1004 = vpop.f32.mrb[0].mxu0
        %v1005 = vadd.f32 %v773, %v1004
        %v1006 = vpop.f32.mrb[0].mxu0
        %1007 = vmatprep.mubr.bf16.mxu0 0
        %1008 = vmatmul.mubr.bf16.gmra.mrb[0].mxu0 %v846
        %v1009 = vpop.f32.mrb[0].mxu0
        %v1010 = vadd.f32 %v773, %v1009
        %v1011 = vpop.f32.mrb[0].mxu0
        %v1012 = vpop.f32.mrb[0].mxu0
        %v1013 = vadd.f32 %v773, %v1012
        %v1014 = vpop.f32.mrb[0].mxu0
        %1015 = vmatprep.mubr.bf16.mxu0 0
        %1016 = vmatmul.mubr.bf16.gmra.mrb[0].mxu0 %v847
        %v1017 = vpop.f32.mrb[0].mxu0
        %v1018 = vadd.f32 %v773, %v1017
        %v1019 = vpop.f32.mrb[0].mxu0
        %v1020 = vpop.f32.mrb[0].mxu0
        %v1021 = vadd.f32 %v773, %v1020
        %v1022 = vpop.f32.mrb[0].mxu0
        %1023 = vmatprep.mubr.bf16.mxu0 0
        %1024 = vmatmul.mubr.bf16.gmra.mrb[0].mxu0 %v848
        %v1025 = vpop.f32.mrb[0].mxu0
        %v1026 = vadd.f32 %v773, %v1025
        %v1027 = vpop.f32.mrb[0].mxu0
        %v1028 = vpop.f32.mrb[0].mxu0
        %v1029 = vadd.f32 %v773, %v1028
        %v1030 = vpop.f32.mrb[0].mxu0
        %1031 = vmatprep.mubr.bf16.mxu0 0
        %1032 = vmatmul.mubr.bf16.gmra.mrb[0].mxu0 %v849
        %v1033 = vpop.f32.mrb[0].mxu0
        %v1034 = vadd.f32 %v773, %v1033
        %v1035 = vpop.f32.mrb[0].mxu0
        %v1036 = vpop.f32.mrb[0].mxu0
        %v1037 = vadd.f32 %v773, %v1036
        %v1038 = vpop.f32.mrb[0].mxu0
        %1039 = vmatprep.mubr.bf16.mxu0 0
        %1040 = vmatmul.mubr.bf16.gmra.mrb[0].mxu0 %v850
        %v1041 = vpop.f32.mrb[0].mxu0
        %v1042 = vadd.f32 %v773, %v1041
        %v1043 = vpop.f32.mrb[0].mxu0
        %v1044 = vpop.f32.mrb[0].mxu0
        %v1045 = vadd.f32 %v773, %v1044
        %v1046 = vpop.f32.mrb[0].mxu0
        %1047 = vmatprep.mubr.bf16.mxu0 0
        %1048 = vmatmul.mubr.bf16.gmra.mrb[0].mxu0 %v851
        %v1049 = vpop.f32.mrb[0].mxu0
        %v1050 = vadd.f32 %v773, %v1049
        %v1051 = vpop.f32.mrb[0].mxu0
        %v1052 = vpop.f32.mrb[0].mxu0
        %v1053 = vadd.f32 %v773, %v1052
        %v1054 = vpop.f32.mrb[0].mxu0
        %1055 = vmatprep.mubr.bf16.mxu0 0
        %1056 = vmatmul.mubr.bf16.gmra.mrb[0].mxu0 %v852
        %v1057 = vpop.f32.mrb[0].mxu0
        %v1058 = vadd.f32 %v773, %v1057
        %v1059 = vpop.f32.mrb[0].mxu0
        %v1060 = vpop.f32.mrb[0].mxu0
        %v1061 = vadd.f32 %v773, %v1060
        %v1062 = vpop.f32.mrb[0].mxu0
        %1063 = vmatprep.mubr.bf16.mxu0 0
        %1064 = vmatmul.mubr.bf16.gmra.mrb[0].mxu0 %v853
        %v1065 = vpop.f32.mrb[0].mxu0
        %v1066 = vadd.f32 %v773, %v1065
        %v1067 = vpop.f32.mrb[0].mxu0
        %v1068 = vpop.f32.mrb[0].mxu0
        %v1069 = vadd.f32 %v773, %v1068
        %v1070 = vpop.f32.mrb[0].mxu0
        %1071 = vmatprep.mubr.bf16.mxu0 0
        %1072 = vmatmul.mubr.bf16.gmra.mrb[0].mxu0 %v854
        %v1073 = vpop.f32.mrb[0].mxu0
        %v1074 = vadd.f32 %v773, %v1073
        %v1075 = vpop.f32.mrb[0].mxu0
        %v1076 = vpop.f32.mrb[0].mxu0
        %v1077 = vadd.f32 %v773, %v1076
        %v1078 = vpop.f32.mrb[0].mxu0
        %1079 = vdwg.mxu0
        %v1080 = vld [vmem:[%s506] sm:$0xf]
        %v1081 = vld [vmem:[%s506 + $0x4] sm:$0xf]
        %v1082 = vld [vmem:[%s506 + $0x8] sm:$0xf]
        %v1083 = vld [vmem:[%s506 + $0xc] sm:$0xf]
        %v1084 = vld [vmem:[%s506 + $0x10] sm:$0xf]
        %v1085 = vld [vmem:[%s506 + $0x14] sm:$0xf]
        %v1086 = vld [vmem:[%s506 + $0x18] sm:$0xf]
        %v1087 = vld [vmem:[%s506 + $0x1c] sm:$0xf]
        %v1088 = vld [vmem:[%s506 + $0x20] sm:$0xf]
        %v1089 = vld [vmem:[%s506 + $0x24] sm:$0xf]
        %v1090 = vld [vmem:[%s506 + $0x28] sm:$0xf]
        %v1091 = vld [vmem:[%s506 + $0x2c] sm:$0xf]
        %v1092 = vld [vmem:[%s506 + $0x30] sm:$0xf]
        %v1093 = vld [vmem:[%s506 + $0x34] sm:$0xf]
        %v1094 = vld [vmem:[%s506 + $0x38] sm:$0xf]
        %v1095 = vld [vmem:[%s506 + $0x3c] sm:$0xf]
        %v1096 = vld [vmem:[%s506 + $0x40] sm:$0xf]
        %v1097 = vld [vmem:[%s506 + $0x44] sm:$0xf]
        %v1098 = vld [vmem:[%s506 + $0x48] sm:$0xf]
        %v1099 = vld [vmem:[%s506 + $0x4c] sm:$0xf]
        %v1100 = vld [vmem:[%s506 + $0x50] sm:$0xf]
        %v1101 = vld [vmem:[%s506 + $0x54] sm:$0xf]
        %v1102 = vld [vmem:[%s506 + $0x58] sm:$0xf]
        %v1103 = vld [vmem:[%s506 + $0x5c] sm:$0xf]
        %v1104 = vld [vmem:[%s506 + $0x60] sm:$0xf]
        %v1105 = vld [vmem:[%s506 + $0x64] sm:$0xf]
        %v1106 = vld [vmem:[%s506 + $0x68] sm:$0xf]
        %v1107 = vld [vmem:[%s506 + $0x6c] sm:$0xf]
        %v1108 = vld [vmem:[%s506 + $0x70] sm:$0xf]
        %v1109 = vld [vmem:[%s506 + $0x74] sm:$0xf]
        %v1110 = vld [vmem:[%s506 + $0x78] sm:$0xf]
        %v1111 = vld [vmem:[%s506 + $0x7c] sm:$0xf]
        %v1112 = vld [vmem:[#allocation11] sm:$0xf]
        %v1113 = vld [vmem:[#allocation11 + $0x4] sm:$0xf]
        %v1114 = vld [vmem:[#allocation11 + $0x8] sm:$0xf]
        %v1115 = vld [vmem:[#allocation11 + $0xc] sm:$0xf]
        %v1116 = vld [vmem:[#allocation11 + $0x10] sm:$0xf]
        %v1117 = vld [vmem:[#allocation11 + $0x14] sm:$0xf]
        %v1118 = vld [vmem:[#allocation11 + $0x18] sm:$0xf]
        %v1119 = vld [vmem:[#allocation11 + $0x1c] sm:$0xf]
        %v1120 = vld [vmem:[#allocation11 + $0x20] sm:$0xf]
        %v1121 = vld [vmem:[#allocation11 + $0x24] sm:$0xf]
        %v1122 = vld [vmem:[#allocation11 + $0x28] sm:$0xf]
        %v1123 = vld [vmem:[#allocation11 + $0x2c] sm:$0xf]
        %v1124 = vld [vmem:[#allocation11 + $0x30] sm:$0xf]
        %v1125 = vld [vmem:[#allocation11 + $0x34] sm:$0xf]
        %v1126 = vld [vmem:[#allocation11 + $0x38] sm:$0xf]
        %v1127 = vld [vmem:[#allocation11 + $0x3c] sm:$0xf]
        %v1128 = vld [vmem:[%s8] sm:$0x1]
        %v1130 = vlaneseq
        %v1131 = vshrl.u32 %v1130, 7
        %v1132 = vsub.s32 0, %v1131
        %v1133 = vrot.slane %v1128, %v1132
        %v1167 = vunpack.c.l.b16 %v1080
        %v1168 = vunpack.c.l.b16 %v1081
        %v1169 = vunpack.c.l.b16 %v1082
        %v1170 = vunpack.c.l.b16 %v1083
        %v1171 = vunpack.c.l.b16 %v1084
        %v1172 = vunpack.c.l.b16 %v1085
        %v1173 = vunpack.c.l.b16 %v1086
        %v1174 = vunpack.c.l.b16 %v1087
        %v1175 = vunpack.c.l.b16 %v1088
        %v1176 = vunpack.c.l.b16 %v1089
        %v1177 = vunpack.c.l.b16 %v1090
        %v1178 = vunpack.c.l.b16 %v1091
        %v1179 = vunpack.c.l.b16 %v1092
        %v1180 = vunpack.c.l.b16 %v1093
        %v1181 = vunpack.c.l.b16 %v1094
        %v1182 = vunpack.c.l.b16 %v1095
        %v1183 = vunpack.c.l.b16 %v1096
        %v1184 = vunpack.c.l.b16 %v1097
        %v1185 = vunpack.c.l.b16 %v1098
        %v1186 = vunpack.c.l.b16 %v1099
        %v1187 = vunpack.c.l.b16 %v1100
        %v1188 = vunpack.c.l.b16 %v1101
        %v1189 = vunpack.c.l.b16 %v1102
        %v1190 = vunpack.c.l.b16 %v1103
        %v1191 = vunpack.c.l.b16 %v1104
        %v1192 = vunpack.c.l.b16 %v1105
        %v1193 = vunpack.c.l.b16 %v1106
        %v1194 = vunpack.c.l.b16 %v1107
        %v1195 = vunpack.c.l.b16 %v1108
        %v1196 = vunpack.c.l.b16 %v1109
        %v1197 = vunpack.c.l.b16 %v1110
        %v1198 = vunpack.c.l.b16 %v1111
        %v1199 = vpack.c.b16 %v1168, %v1167
        %v1200 = vpack.c.b16 %v1170, %v1169
        %v1201 = vpack.c.b16 %v1172, %v1171
        %v1202 = vpack.c.b16 %v1174, %v1173
        %v1203 = vpack.c.b16 %v1176, %v1175
        %v1204 = vpack.c.b16 %v1178, %v1177
        %v1205 = vpack.c.b16 %v1180, %v1179
        %v1206 = vpack.c.b16 %v1182, %v1181
        %v1207 = vpack.c.b16 %v1184, %v1183
        %v1208 = vpack.c.b16 %v1186, %v1185
        %v1209 = vpack.c.b16 %v1188, %v1187
        %v1210 = vpack.c.b16 %v1190, %v1189
        %v1211 = vpack.c.b16 %v1192, %v1191
        %v1212 = vpack.c.b16 %v1194, %v1193
        %v1213 = vpack.c.b16 %v1196, %v1195
        %v1214 = vpack.c.b16 %v1198, %v1197
        %v1247 = vunpack.c.l.b16 %v1112
        %v1248 = vunpack.c.l.b16 %v1113
        %v1249 = vunpack.c.l.b16 %v1114
        %v1250 = vunpack.c.l.b16 %v1115
        %v1251 = vunpack.c.l.b16 %v1116
        %v1252 = vunpack.c.l.b16 %v1117
        %v1253 = vunpack.c.l.b16 %v1118
        %v1254 = vunpack.c.l.b16 %v1119
        %v1255 = vunpack.c.l.b16 %v1120
        %v1256 = vunpack.c.l.b16 %v1121
        %v1257 = vunpack.c.l.b16 %v1122
        %v1258 = vunpack.c.l.b16 %v1123
        %v1259 = vunpack.c.l.b16 %v1124
        %v1260 = vunpack.c.l.b16 %v1125
        %v1261 = vunpack.c.l.b16 %v1126
        %v1262 = vunpack.c.l.b16 %v1127
        %v1263 = vpack.c.b16 %v1248, %v1247
        %v1264 = vpack.c.b16 %v1250, %v1249
        %v1265 = vpack.c.b16 %v1252, %v1251
        %v1266 = vpack.c.b16 %v1254, %v1253
        %v1267 = vpack.c.b16 %v1256, %v1255
        %v1268 = vpack.c.b16 %v1258, %v1257
        %v1269 = vpack.c.b16 %v1260, %v1259
        %v1270 = vpack.c.b16 %v1262, %v1261
        %1279 = vmatprep.subr.bf16.mxu0 0
        %1280 = vmatpush1.bf16.msra.mxu0 %v1263
        %1281 = vmatprep.subr.bf16.mxu0 0
        %1282 = vmatpush1.bf16.msra.mxu0 %v1264
        %1283 = vmatprep.subr.bf16.mxu0 0
        %1284 = vmatpush1.bf16.msra.mxu0 %v1265
        %1285 = vmatprep.subr.bf16.mxu0 0
        %1286 = vmatpush1.bf16.msra.mxu0 %v1266
        %1287 = vmatprep.subr.bf16.mxu0 0
        %1288 = vmatpush1.bf16.msra.mxu0 %v1267
        %1289 = vmatprep.subr.bf16.mxu0 0
        %1290 = vmatpush1.bf16.msra.mxu0 %v1268
        %1291 = vmatprep.subr.bf16.mxu0 0
        %1292 = vmatpush1.bf16.msra.mxu0 %v1269
        %1293 = vmatprep.subr.bf16.mxu0 0
        %1294 = vmatpush1.bf16.msra.mxu0 %v1270
        %1295 = vmatprep.subr.bf16.mxu0 0
        %1296 = vmatpush1.bf16.msra.mxu0 0
        %1297 = vmatprep.subr.bf16.mxu0 0
        %1298 = vmatpush1.bf16.msra.mxu0 0
        %1299 = vmatprep.subr.bf16.mxu0 0
        %1300 = vmatpush1.bf16.msra.mxu0 0
        %1301 = vmatprep.subr.bf16.mxu0 0
        %1302 = vmatpush1.bf16.msra.mxu0 0
        %1303 = vmatprep.subr.bf16.mxu0 0
        %1304 = vmatpush1.bf16.msra.mxu0 0
        %1305 = vmatprep.subr.bf16.mxu0 0
        %1306 = vmatpush1.bf16.msra.mxu0 0
        %1307 = vmatprep.subr.bf16.mxu0 0
        %1308 = vmatpush1.bf16.msra.mxu0 0
        %1309 = vmatprep.subr.bf16.mxu0 0
        %1310 = vmatpush1.bf16.msra.mxu0 0
        %1311 = vmatprep.mubr.bf16.mxu0 0
        %1312 = vmatmul.mubr.bf16.gmra.mrb[0].mxu0 %v1199
        %v1313 = vpop.f32.mrb[0].mxu0
        %v1314 = vadd.f32 %v1133, %v1313
        %v1315 = vpop.f32.mrb[0].mxu0
        %v1316 = vpop.f32.mrb[0].mxu0
        %v1317 = vadd.f32 %v1133, %v1316
        %v1318 = vpop.f32.mrb[0].mxu0
        %1319 = vmatprep.mubr.bf16.mxu0 0
        %1320 = vmatmul.mubr.bf16.gmra.mrb[0].mxu0 %v1200
        %v1321 = vpop.f32.mrb[0].mxu0
        %v1322 = vadd.f32 %v1133, %v1321
        %v1323 = vpop.f32.mrb[0].mxu0
        %v1324 = vpop.f32.mrb[0].mxu0
        %v1325 = vadd.f32 %v1133, %v1324
        %v1326 = vpop.f32.mrb[0].mxu0
        %1327 = vmatprep.mubr.bf16.mxu0 0
        %1328 = vmatmul.mubr.bf16.gmra.mrb[0].mxu0 %v1201
        %v1329 = vpop.f32.mrb[0].mxu0
        %v1330 = vadd.f32 %v1133, %v1329
        %v1331 = vpop.f32.mrb[0].mxu0
        %v1332 = vpop.f32.mrb[0].mxu0
        %v1333 = vadd.f32 %v1133, %v1332
        %v1334 = vpop.f32.mrb[0].mxu0
        %1335 = vmatprep.mubr.bf16.mxu0 0
        %1336 = vmatmul.mubr.bf16.gmra.mrb[0].mxu0 %v1202
        %v1337 = vpop.f32.mrb[0].mxu0
        %v1338 = vadd.f32 %v1133, %v1337
        %v1339 = vpop.f32.mrb[0].mxu0
        %v1340 = vpop.f32.mrb[0].mxu0
        %v1341 = vadd.f32 %v1133, %v1340
        %v1342 = vpop.f32.mrb[0].mxu0
        %1343 = vmatprep.mubr.bf16.mxu0 0
        %1344 = vmatmul.mubr.bf16.gmra.mrb[0].mxu0 %v1203
        %v1345 = vpop.f32.mrb[0].mxu0
        %v1346 = vadd.f32 %v1133, %v1345
        %v1347 = vpop.f32.mrb[0].mxu0
        %v1348 = vpop.f32.mrb[0].mxu0
        %v1349 = vadd.f32 %v1133, %v1348
        %v1350 = vpop.f32.mrb[0].mxu0
        %1351 = vmatprep.mubr.bf16.mxu0 0
        %1352 = vmatmul.mubr.bf16.gmra.mrb[0].mxu0 %v1204
        %v1353 = vpop.f32.mrb[0].mxu0
        %v1354 = vadd.f32 %v1133, %v1353
        %v1355 = vpop.f32.mrb[0].mxu0
        %v1356 = vpop.f32.mrb[0].mxu0
        %v1357 = vadd.f32 %v1133, %v1356
        %v1358 = vpop.f32.mrb[0].mxu0
        %1359 = vmatprep.mubr.bf16.mxu0 0
        %1360 = vmatmul.mubr.bf16.gmra.mrb[0].mxu0 %v1205
        %v1361 = vpop.f32.mrb[0].mxu0
        %v1362 = vadd.f32 %v1133, %v1361
        %v1363 = vpop.f32.mrb[0].mxu0
        %v1364 = vpop.f32.mrb[0].mxu0
        %v1365 = vadd.f32 %v1133, %v1364
        %v1366 = vpop.f32.mrb[0].mxu0
        %1367 = vmatprep.mubr.bf16.mxu0 0
        %1368 = vmatmul.mubr.bf16.gmra.mrb[0].mxu0 %v1206
        %v1369 = vpop.f32.mrb[0].mxu0
        %v1370 = vadd.f32 %v1133, %v1369
        %v1371 = vpop.f32.mrb[0].mxu0
        %v1372 = vpop.f32.mrb[0].mxu0
        %v1373 = vadd.f32 %v1133, %v1372
        %v1374 = vpop.f32.mrb[0].mxu0
        %1375 = vmatprep.mubr.bf16.mxu0 0
        %1376 = vmatmul.mubr.bf16.gmra.mrb[0].mxu0 %v1207
        %v1377 = vpop.f32.mrb[0].mxu0
        %v1378 = vadd.f32 %v1133, %v1377
        %v1379 = vpop.f32.mrb[0].mxu0
        %v1380 = vpop.f32.mrb[0].mxu0
        %v1381 = vadd.f32 %v1133, %v1380
        %v1382 = vpop.f32.mrb[0].mxu0
        %1383 = vmatprep.mubr.bf16.mxu0 0
        %1384 = vmatmul.mubr.bf16.gmra.mrb[0].mxu0 %v1208
        %v1385 = vpop.f32.mrb[0].mxu0
        %v1386 = vadd.f32 %v1133, %v1385
        %v1387 = vpop.f32.mrb[0].mxu0
        %v1388 = vpop.f32.mrb[0].mxu0
        %v1389 = vadd.f32 %v1133, %v1388
        %v1390 = vpop.f32.mrb[0].mxu0
        %1391 = vmatprep.mubr.bf16.mxu0 0
        %1392 = vmatmul.mubr.bf16.gmra.mrb[0].mxu0 %v1209
        %v1393 = vpop.f32.mrb[0].mxu0
        %v1394 = vadd.f32 %v1133, %v1393
        %v1395 = vpop.f32.mrb[0].mxu0
        %v1396 = vpop.f32.mrb[0].mxu0
        %v1397 = vadd.f32 %v1133, %v1396
        %v1398 = vpop.f32.mrb[0].mxu0
        %1399 = vmatprep.mubr.bf16.mxu0 0
        %1400 = vmatmul.mubr.bf16.gmra.mrb[0].mxu0 %v1210
        %v1401 = vpop.f32.mrb[0].mxu0
        %v1402 = vadd.f32 %v1133, %v1401
        %v1403 = vpop.f32.mrb[0].mxu0
        %v1404 = vpop.f32.mrb[0].mxu0
        %v1405 = vadd.f32 %v1133, %v1404
        %v1406 = vpop.f32.mrb[0].mxu0
        %1407 = vmatprep.mubr.bf16.mxu0 0
        %1408 = vmatmul.mubr.bf16.gmra.mrb[0].mxu0 %v1211
        %v1409 = vpop.f32.mrb[0].mxu0
        %v1410 = vadd.f32 %v1133, %v1409
        %v1411 = vpop.f32.mrb[0].mxu0
        %v1412 = vpop.f32.mrb[0].mxu0
        %v1413 = vadd.f32 %v1133, %v1412
        %v1414 = vpop.f32.mrb[0].mxu0
        %1415 = vmatprep.mubr.bf16.mxu0 0
        %1416 = vmatmul.mubr.bf16.gmra.mrb[0].mxu0 %v1212
        %v1417 = vpop.f32.mrb[0].mxu0
        %v1418 = vadd.f32 %v1133, %v1417
        %v1419 = vpop.f32.mrb[0].mxu0
        %v1420 = vpop.f32.mrb[0].mxu0
        %v1421 = vadd.f32 %v1133, %v1420
        %v1422 = vpop.f32.mrb[0].mxu0
        %1423 = vmatprep.mubr.bf16.mxu0 0
        %1424 = vmatmul.mubr.bf16.gmra.mrb[0].mxu0 %v1213
        %v1425 = vpop.f32.mrb[0].mxu0
        %v1426 = vadd.f32 %v1133, %v1425
        %v1427 = vpop.f32.mrb[0].mxu0
        %v1428 = vpop.f32.mrb[0].mxu0
        %v1429 = vadd.f32 %v1133, %v1428
        %v1430 = vpop.f32.mrb[0].mxu0
        %1431 = vmatprep.mubr.bf16.mxu0 0
        %1432 = vmatmul.mubr.bf16.gmra.mrb[0].mxu0 %v1214
        %v1433 = vpop.f32.mrb[0].mxu0
        %v1434 = vadd.f32 %v1133, %v1433
        %v1435 = vpop.f32.mrb[0].mxu0
        %v1436 = vpop.f32.mrb[0].mxu0
        %v1437 = vadd.f32 %v1133, %v1436
        %v1438 = vpop.f32.mrb[0].mxu0
        %1439 = vdwg.mxu0
        %v1440 = vpack.c.bf16 %v709, %v706
        %v1441 = vpack.c.bf16 %v717, %v714
        %v1442 = vpack.c.bf16 %v957, %v954
        %v1443 = vpack.c.bf16 %v965, %v962
        %v1444 = vpack.c.bf16 %v973, %v970
        %v1445 = vpack.c.bf16 %v981, %v978
        %v1446 = vpack.c.bf16 %v989, %v986
        %v1447 = vpack.c.bf16 %v997, %v994
        %v1448 = vpack.c.bf16 %v1005, %v1002
        %v1449 = vpack.c.bf16 %v1013, %v1010
        %v1450 = vpack.c.bf16 %v1021, %v1018
        %v1451 = vpack.c.bf16 %v1029, %v1026
        %v1452 = vpack.c.bf16 %v1037, %v1034
        %v1453 = vpack.c.bf16 %v1045, %v1042
        %v1454 = vpack.c.bf16 %v1053, %v1050
        %v1455 = vpack.c.bf16 %v1061, %v1058
        %v1456 = vpack.c.bf16 %v1069, %v1066
        %v1457 = vpack.c.bf16 %v1077, %v1074
        %1458 = vmatprep.subr.bf16.mxu0 0
        %1459 = vmatpush1.bf16.xpose.msra.mxu0 %v1442
        %1460 = vmatprep.subr.bf16.mxu0 0
        %1461 = vmatpush1.bf16.xpose.msra.mxu0 %v1443
        %1462 = vmatprep.subr.bf16.mxu0 0
        %1463 = vmatpush1.bf16.xpose.msra.mxu0 %v1444
        %1464 = vmatprep.subr.bf16.mxu0 0
        %1465 = vmatpush1.bf16.xpose.msra.mxu0 %v1445
        %1466 = vmatprep.subr.bf16.mxu0 0
        %1467 = vmatpush1.bf16.xpose.msra.mxu0 %v1446
        %1468 = vmatprep.subr.bf16.mxu0 0
        %1469 = vmatpush1.bf16.xpose.msra.mxu0 %v1447
        %1470 = vmatprep.subr.bf16.mxu0 0
        %1471 = vmatpush1.bf16.xpose.msra.mxu0 %v1448
        %1472 = vmatprep.subr.bf16.mxu0 0
        %1473 = vmatpush1.bf16.xpose.msra.mxu0 %v1449
        %1474 = vmatprep.subr.bf16.mxu0 0
        %1475 = vmatpush1.bf16.xpose.msra.mxu0 0
        %1476 = vmatprep.subr.bf16.mxu0 0
        %1477 = vmatpush1.bf16.xpose.msra.mxu0 0
        %1478 = vmatprep.subr.bf16.mxu0 0
        %1479 = vmatpush1.bf16.xpose.msra.mxu0 0
        %1480 = vmatprep.subr.bf16.mxu0 0
        %1481 = vmatpush1.bf16.xpose.msra.mxu0 0
        %1482 = vmatprep.subr.bf16.mxu0 0
        %1483 = vmatpush1.bf16.xpose.msra.mxu0 0
        %1484 = vmatprep.subr.bf16.mxu0 0
        %1485 = vmatpush1.bf16.xpose.msra.mxu0 0
        %1486 = vmatprep.subr.bf16.mxu0 0
        %1487 = vmatpush1.bf16.xpose.msra.mxu0 0
        %1488 = vmatprep.subr.bf16.mxu0 0
        %1489 = vmatpush1.bf16.xpose.msra.mxu0 0
        %1490 = vmatprep.mubr.bf16.mxu0 0
        %1491 = vmatmul.mubr.bf16.gmra.mrb[0].mxu0 %v1440
        %v1492 = vpop.f32.mrb[0].mxu0
        %v1493 = vadd.f32 0.0, %v1492
        %v1494 = vpop.f32.mrb[0].mxu0
        %v1495 = vpop.f32.mrb[0].mxu0
        %v1496 = vadd.f32 0.0, %v1495
        %v1497 = vpop.f32.mrb[0].mxu0
        %1498 = vdwg.mxu0
        %1499 = vmatprep.subr.bf16.mxu0 0
        %1500 = vmatpush1.bf16.xpose.msra.mxu0 %v1450
        %1501 = vmatprep.subr.bf16.mxu0 0
        %1502 = vmatpush1.bf16.xpose.msra.mxu0 %v1451
        %1503 = vmatprep.subr.bf16.mxu0 0
        %1504 = vmatpush1.bf16.xpose.msra.mxu0 %v1452
        %1505 = vmatprep.subr.bf16.mxu0 0
        %1506 = vmatpush1.bf16.xpose.msra.mxu0 %v1453
        %1507 = vmatprep.subr.bf16.mxu0 0
        %1508 = vmatpush1.bf16.xpose.msra.mxu0 %v1454
        %1509 = vmatprep.subr.bf16.mxu0 0
        %1510 = vmatpush1.bf16.xpose.msra.mxu0 %v1455
        %1511 = vmatprep.subr.bf16.mxu0 0
        %1512 = vmatpush1.bf16.xpose.msra.mxu0 %v1456
        %1513 = vmatprep.subr.bf16.mxu0 0
        %1514 = vmatpush1.bf16.xpose.msra.mxu0 %v1457
        %1515 = vmatprep.subr.bf16.mxu0 0
        %1516 = vmatpush1.bf16.xpose.msra.mxu0 0
        %1517 = vmatprep.subr.bf16.mxu0 0
        %1518 = vmatpush1.bf16.xpose.msra.mxu0 0
        %1519 = vmatprep.subr.bf16.mxu0 0
        %1520 = vmatpush1.bf16.xpose.msra.mxu0 0
        %1521 = vmatprep.subr.bf16.mxu0 0
        %1522 = vmatpush1.bf16.xpose.msra.mxu0 0
        %1523 = vmatprep.subr.bf16.mxu0 0
        %1524 = vmatpush1.bf16.xpose.msra.mxu0 0
        %1525 = vmatprep.subr.bf16.mxu0 0
        %1526 = vmatpush1.bf16.xpose.msra.mxu0 0
        %1527 = vmatprep.subr.bf16.mxu0 0
        %1528 = vmatpush1.bf16.xpose.msra.mxu0 0
        %1529 = vmatprep.subr.bf16.mxu0 0
        %1530 = vmatpush1.bf16.xpose.msra.mxu0 0
        %1531 = vmatprep.mubr.bf16.mxu0 0
        %1532 = vmatmul.mubr.bf16.gmra.mrb[0].mxu0 %v1441
        %v1533 = vpop.f32.mrb[0].mxu0
        %v1534 = vadd.f32 0.0, %v1533
        %v1535 = vpop.f32.mrb[0].mxu0
        %v1536 = vpop.f32.mrb[0].mxu0
        %v1537 = vadd.f32 0.0, %v1536
        %v1538 = vpop.f32.mrb[0].mxu0
        %1539 = vdwg.mxu0
        %v1540 = vlaneseq
        %v1541 = vand.u32 %v1540, 127
        %vm1542 = vcmp.lt.s32.totalorder %v1541, 8
        %v1543 = vsel %vm1542, %v1493, -1e+30
        %v1544 = vsel %vm1542, %v1496, -1e+30
        %v1545 = vsel %vm1542, %v1534, -1e+30
        %v1546 = vsel %vm1542, %v1537, -1e+30
        %1547 = vmax.xlane.f32.xlu0 %v1543
        %v1548 = vpop.xlane.xlu0 %1547
        %1549 = vmax.xlane.f32.xlu0 %v1544
        %v1550 = vpop.xlane.xlu0 %1549
        %1551 = vmax.xlane.f32.xlu0 %v1545
        %v1552 = vpop.xlane.xlu0 %1551
        %1553 = vmax.xlane.f32.xlu0 %v1546
        %v1554 = vpop.xlane.xlu0 %1553
        %v1555 = vsub.f32 %v1543, %v1548
        %v1556 = vsub.f32 %v1544, %v1550
        %v1557 = vsub.f32 %v1545, %v1552
        %v1558 = vsub.f32 %v1546, %v1554
        %v1559 = vmul.f32 %v1555, 1.442695
        %v1560 = vpow.pop %v1559
        %v1561 = vmul.f32 %v1556, 1.442695
        %v1562 = vpow.pop %v1561
        %v1563 = vmul.f32 %v1557, 1.442695
        %v1564 = vpow.pop %v1563
        %v1565 = vmul.f32 %v1558, 1.442695
        %v1566 = vpow.pop %v1565
        %1567 = vadd.xlane.f32.xlu0 %v1560
        %v1568 = vpop.xlane.xlu0 %1567
        %1569 = vadd.xlane.f32.xlu0 %v1562
        %v1570 = vpop.xlane.xlu0 %1569
        %1571 = vadd.xlane.f32.xlu0 %v1564
        %v1572 = vpop.xlane.xlu0 %1571
        %1573 = vadd.xlane.f32.xlu0 %v1566
        %v1574 = vpop.xlane.xlu0 %1573
        %v1575 = vrcp.pop %v1568
        %v1576 = vmul.f32 1.0, %v1575
        %v1577 = vrcp.pop %v1570
        %v1578 = vmul.f32 1.0, %v1577
        %v1579 = vrcp.pop %v1572
        %v1580 = vmul.f32 1.0, %v1579
        %v1581 = vrcp.pop %v1574
        %v1582 = vmul.f32 1.0, %v1581
        %v1583 = vmul.f32 %v1560, %v1576
        %v1584 = vmul.f32 %v1562, %v1578
        %v1585 = vmul.f32 %v1564, %v1580
        %v1586 = vmul.f32 %v1566, %v1582
        %v1587 = vpack.c.bf16 %v1584, %v1583
        %v1588 = vpack.c.bf16 %v1586, %v1585
        %v1589 = vpack.c.bf16 %v1317, %v1314
        %v1590 = vpack.c.bf16 %v1325, %v1322
        %v1591 = vpack.c.bf16 %v1333, %v1330
        %v1592 = vpack.c.bf16 %v1341, %v1338
        %v1593 = vpack.c.bf16 %v1349, %v1346
        %v1594 = vpack.c.bf16 %v1357, %v1354
        %v1595 = vpack.c.bf16 %v1365, %v1362
        %v1596 = vpack.c.bf16 %v1373, %v1370
        %v1597 = vpack.c.bf16 %v1381, %v1378
        %v1598 = vpack.c.bf16 %v1389, %v1386
        %v1599 = vpack.c.bf16 %v1397, %v1394
        %v1600 = vpack.c.bf16 %v1405, %v1402
        %v1601 = vpack.c.bf16 %v1413, %v1410
        %v1602 = vpack.c.bf16 %v1421, %v1418
        %v1603 = vpack.c.bf16 %v1429, %v1426
        %v1604 = vpack.c.bf16 %v1437, %v1434
        %1605 = vmatprep.subr.bf16.mxu0 0
        %1606 = vmatpush1.bf16.msra.mxu0 %v1589
        %1607 = vmatprep.subr.bf16.mxu0 0
        %1608 = vmatpush1.bf16.msra.mxu0 %v1590
        %1609 = vmatprep.subr.bf16.mxu0 0
        %1610 = vmatpush1.bf16.msra.mxu0 %v1591
        %1611 = vmatprep.subr.bf16.mxu0 0
        %1612 = vmatpush1.bf16.msra.mxu0 %v1592
        %1613 = vmatprep.subr.bf16.mxu0 0
        %1614 = vmatpush1.bf16.msra.mxu0 %v1593
        %1615 = vmatprep.subr.bf16.mxu0 0
        %1616 = vmatpush1.bf16.msra.mxu0 %v1594
        %1617 = vmatprep.subr.bf16.mxu0 0
        %1618 = vmatpush1.bf16.msra.mxu0 %v1595
        %1619 = vmatprep.subr.bf16.mxu0 0
        %1620 = vmatpush1.bf16.msra.mxu0 %v1596
        %1621 = vmatprep.subr.bf16.mxu0 0
        %1622 = vmatpush1.bf16.msra.mxu0 0
        %1623 = vmatprep.subr.bf16.mxu0 0
        %1624 = vmatpush1.bf16.msra.mxu0 0
        %1625 = vmatprep.subr.bf16.mxu0 0
        %1626 = vmatpush1.bf16.msra.mxu0 0
        %1627 = vmatprep.subr.bf16.mxu0 0
        %1628 = vmatpush1.bf16.msra.mxu0 0
        %1629 = vmatprep.subr.bf16.mxu0 0
        %1630 = vmatpush1.bf16.msra.mxu0 0
        %1631 = vmatprep.subr.bf16.mxu0 0
        %1632 = vmatpush1.bf16.msra.mxu0 0
        %1633 = vmatprep.subr.bf16.mxu0 0
        %1634 = vmatpush1.bf16.msra.mxu0 0
        %1635 = vmatprep.subr.bf16.mxu0 0
        %1636 = vmatpush1.bf16.msra.mxu0 0
        %1637 = vmatprep.mubr.bf16.mxu0 0
        %1638 = vmatmul.mubr.bf16.gmra.mrb[0].mxu0 %v1587
        %v1639 = vpop.f32.mrb[0].mxu0
        %v1640 = vadd.f32 0.0, %v1639
        %v1641 = vpop.f32.mrb[0].mxu0
        %v1642 = vpop.f32.mrb[0].mxu0
        %v1643 = vadd.f32 0.0, %v1642
        %v1644 = vpop.f32.mrb[0].mxu0
        %1645 = vdwg.mxu0
        %1646 = vmatprep.subr.bf16.mxu0 0
        %1647 = vmatpush1.bf16.msra.mxu0 %v1597
        %1648 = vmatprep.subr.bf16.mxu0 0
        %1649 = vmatpush1.bf16.msra.mxu0 %v1598
        %1650 = vmatprep.subr.bf16.mxu0 0
        %1651 = vmatpush1.bf16.msra.mxu0 %v1599
        %1652 = vmatprep.subr.bf16.mxu0 0
        %1653 = vmatpush1.bf16.msra.mxu0 %v1600
        %1654 = vmatprep.subr.bf16.mxu0 0
        %1655 = vmatpush1.bf16.msra.mxu0 %v1601
        %1656 = vmatprep.subr.bf16.mxu0 0
        %1657 = vmatpush1.bf16.msra.mxu0 %v1602
        %1658 = vmatprep.subr.bf16.mxu0 0
        %1659 = vmatpush1.bf16.msra.mxu0 %v1603
        %1660 = vmatprep.subr.bf16.mxu0 0
        %1661 = vmatpush1.bf16.msra.mxu0 %v1604
        %1662 = vmatprep.subr.bf16.mxu0 0
        %1663 = vmatpush1.bf16.msra.mxu0 0
        %1664 = vmatprep.subr.bf16.mxu0 0
        %1665 = vmatpush1.bf16.msra.mxu0 0
        %1666 = vmatprep.subr.bf16.mxu0 0
        %1667 = vmatpush1.bf16.msra.mxu0 0
        %1668 = vmatprep.subr.bf16.mxu0 0
        %1669 = vmatpush1.bf16.msra.mxu0 0
        %1670 = vmatprep.subr.bf16.mxu0 0
        %1671 = vmatpush1.bf16.msra.mxu0 0
        %1672 = vmatprep.subr.bf16.mxu0 0
        %1673 = vmatpush1.bf16.msra.mxu0 0
        %1674 = vmatprep.subr.bf16.mxu0 0
        %1675 = vmatpush1.bf16.msra.mxu0 0
        %1676 = vmatprep.subr.bf16.mxu0 0
        %1677 = vmatpush1.bf16.msra.mxu0 0
        %1678 = vmatprep.mubr.bf16.mxu0 0
        %1679 = vmatmul.mubr.bf16.gmra.mrb[0].mxu0 %v1588
        %v1680 = vpop.f32.mrb[0].mxu0
        %v1681 = vadd.f32 0.0, %v1680
        %v1682 = vpop.f32.mrb[0].mxu0
        %v1683 = vpop.f32.mrb[0].mxu0
        %v1684 = vadd.f32 0.0, %v1683
        %v1685 = vpop.f32.mrb[0].mxu0
        %1686 = vdwg.mxu0
        %v1687 = vpack.c.bf16 %v1643, %v1640
        %v1688 = vpack.c.bf16 %v1684, %v1681
        %v1689 = vld [vmem:[#allocation13] sm:$0xf]
        %v1690 = vld [vmem:[#allocation13 + $0x4] sm:$0xf]
        %v1691 = vld [vmem:[#allocation13 + $0x8] sm:$0xf]
        %v1692 = vld [vmem:[#allocation13 + $0xc] sm:$0xf]
        %v1693 = vld [vmem:[#allocation13 + $0x10] sm:$0xf]
        %v1694 = vld [vmem:[#allocation13 + $0x14] sm:$0xf]
        %v1695 = vld [vmem:[#allocation13 + $0x18] sm:$0xf]
        %v1696 = vld [vmem:[#allocation13 + $0x1c] sm:$0xf]
        %v1697 = vld [vmem:[#allocation13 + $0x20] sm:$0xf]
        %v1698 = vld [vmem:[#allocation13 + $0x24] sm:$0xf]
        %v1699 = vld [vmem:[#allocation13 + $0x28] sm:$0xf]
        %v1700 = vld [vmem:[#allocation13 + $0x2c] sm:$0xf]
        %v1701 = vld [vmem:[#allocation13 + $0x30] sm:$0xf]
        %v1702 = vld [vmem:[#allocation13 + $0x34] sm:$0xf]
        %v1703 = vld [vmem:[#allocation13 + $0x38] sm:$0xf]
        %v1704 = vld [vmem:[#allocation13 + $0x3c] sm:$0xf]
        %v1705 = vld [vmem:[%s10] sm:$0x1]
        %v1707 = vlaneseq
        %v1708 = vshrl.u32 %v1707, 7
        %v1709 = vsub.s32 0, %v1708
        %v1710 = vrot.slane %v1705, %v1709
        %v1728 = vunpack.c.l.b16 %v1689
        %v1729 = vunpack.c.l.b16 %v1690
        %v1730 = vunpack.c.l.b16 %v1691
        %v1731 = vunpack.c.l.b16 %v1692
        %v1732 = vunpack.c.l.b16 %v1693
        %v1733 = vunpack.c.l.b16 %v1694
        %v1734 = vunpack.c.l.b16 %v1695
        %v1735 = vunpack.c.l.b16 %v1696
        %v1736 = vunpack.c.l.b16 %v1697
        %v1737 = vunpack.c.l.b16 %v1698
        %v1738 = vunpack.c.l.b16 %v1699
        %v1739 = vunpack.c.l.b16 %v1700
        %v1740 = vunpack.c.l.b16 %v1701
        %v1741 = vunpack.c.l.b16 %v1702
        %v1742 = vunpack.c.l.b16 %v1703
        %v1743 = vunpack.c.l.b16 %v1704
        %v1744 = vpack.c.b16 %v1729, %v1728
        %v1745 = vpack.c.b16 %v1731, %v1730
        %v1746 = vpack.c.b16 %v1733, %v1732
        %v1747 = vpack.c.b16 %v1735, %v1734
        %v1748 = vpack.c.b16 %v1737, %v1736
        %v1749 = vpack.c.b16 %v1739, %v1738
        %v1750 = vpack.c.b16 %v1741, %v1740
        %v1751 = vpack.c.b16 %v1743, %v1742
        %1760 = vmatprep.subr.bf16.mxu0 0
        %1761 = vmatpush1.bf16.msra.mxu0 %v1744
        %1762 = vmatprep.subr.bf16.mxu0 0
        %1763 = vmatpush1.bf16.msra.mxu0 %v1745
        %1764 = vmatprep.subr.bf16.mxu0 0
        %1765 = vmatpush1.bf16.msra.mxu0 %v1746
        %1766 = vmatprep.subr.bf16.mxu0 0
        %1767 = vmatpush1.bf16.msra.mxu0 %v1747
        %1768 = vmatprep.subr.bf16.mxu0 0
        %1769 = vmatpush1.bf16.msra.mxu0 %v1748
        %1770 = vmatprep.subr.bf16.mxu0 0
        %1771 = vmatpush1.bf16.msra.mxu0 %v1749
        %1772 = vmatprep.subr.bf16.mxu0 0
        %1773 = vmatpush1.bf16.msra.mxu0 %v1750
        %1774 = vmatprep.subr.bf16.mxu0 0
        %1775 = vmatpush1.bf16.msra.mxu0 %v1751
        %1776 = vmatprep.subr.bf16.mxu0 0
        %1777 = vmatpush1.bf16.msra.mxu0 0
        %1778 = vmatprep.subr.bf16.mxu0 0
        %1779 = vmatpush1.bf16.msra.mxu0 0
        %1780 = vmatprep.subr.bf16.mxu0 0
        %1781 = vmatpush1.bf16.msra.mxu0 0
        %1782 = vmatprep.subr.bf16.mxu0 0
        %1783 = vmatpush1.bf16.msra.mxu0 0
        %1784 = vmatprep.subr.bf16.mxu0 0
        %1785 = vmatpush1.bf16.msra.mxu0 0
        %1786 = vmatprep.subr.bf16.mxu0 0
        %1787 = vmatpush1.bf16.msra.mxu0 0
        %1788 = vmatprep.subr.bf16.mxu0 0
        %1789 = vmatpush1.bf16.msra.mxu0 0
        %1790 = vmatprep.subr.bf16.mxu0 0
        %1791 = vmatpush1.bf16.msra.mxu0 0
        %1792 = vmatprep.mubr.bf16.mxu0 0
        %1793 = vmatmul.mubr.bf16.gmra.mrb[0].mxu0 %v1687
        %v1794 = vpop.f32.mrb[0].mxu0
        %v1795 = vadd.f32 %v1710, %v1794
        %v1796 = vpop.f32.mrb[0].mxu0
        %v1797 = vpop.f32.mrb[0].mxu0
        %v1798 = vadd.f32 %v1710, %v1797
        %v1799 = vpop.f32.mrb[0].mxu0
        %1800 = vmatprep.mubr.bf16.mxu0 0
        %1801 = vmatmul.mubr.bf16.gmra.mrb[0].mxu0 %v1688
        %v1802 = vpop.f32.mrb[0].mxu0
        %v1803 = vadd.f32 %v1710, %v1802
        %v1804 = vpop.f32.mrb[0].mxu0
        %v1805 = vpop.f32.mrb[0].mxu0
        %v1806 = vadd.f32 %v1710, %v1805
        %v1807 = vpop.f32.mrb[0].mxu0
        %1808 = vdwg.mxu0
        %1809 = vst [vmem:[%s570] sm:$0xff] %v1795
        %1810 = vst [vmem:[%s570 + $0x8] sm:$0xff] %v1798
        %1811 = vst [vmem:[%s570 + $0x10] sm:$0xff] %v1803
        %1812 = vst [vmem:[%s570 + $0x18] sm:$0xff] %v1806
        %1813 = vst [vmem:[%s577] sm:$0xff] %v1583
        %1814 = vst [vmem:[%s577 + $0x8] sm:$0xff] %v1584
        %1815 = vst [vmem:[%s577 + $0x10] sm:$0xff] %v1585
        %1816 = vst [vmem:[%s577 + $0x18] sm:$0xff] %v1586
        %s1817 = sand.u32 %s292, 1
        %s1818 = scalar_lea.sflag [#allocation4], %s1817
        %s1819 = sand.u32 %s292, 1
        %s1820 = smul.addr %s1819, 32
        %s1821 = scalar_lea.vmem [#allocation14], %s1820
        %s1822 = sand.u32 %s318, 1
        %s1823 = scalar_lea.sflag [#allocation16], %s1822
        %s1824 = sand.u32 %s318, 1
        %s1825 = smul.addr %s1824, 32
        %s1826 = scalar_lea.vmem [#allocation15], %s1825
        // Predicated region
        $region93: #{tpu_custom_call.1} parent=63 // pred_check
          %p1827 = pneg %p302
        $region94: #{tpu_custom_call.1} parent=63 // pred_check_branch
          %1829 = sbr.rel (%p1827) target = $region96
        $region95: #{tpu_custom_call.1} parent=63 // pred_region
          %s1830 = smul.u32 4, %s38
          %s1832 = ssub.s32 512, 512
          %1833 = vsyncadd %s1818, %s1832
          %s1834 = smul.addr %s1830, 128
          %s1835 = scalar_lea.hbm %s11, %s1834
          %s1836 = sshll.u32 %s1821, 4
          %s1837 = int_to_ptr.vmem [resolvable:$true] %s1836
          %1842 = dma.vmem_to_hbm [thread:$0]  %s1837, 512, %s1835, %s1818, 128, 128, 8
        $region96: #{tpu_custom_call.1} parent=63 // pred_fallthru
          _
        // Predicated region
        $region97: #{tpu_custom_call.1} parent=63 // pred_check
          %p1843 = pneg %p328
        $region98: #{tpu_custom_call.1} parent=63 // pred_check_branch
          %1845 = sbr.rel (%p1843) target = $region100
        $region99: #{tpu_custom_call.1} parent=63 // pred_region
          %s1846 = smul.u32 4, %s38
          %s1848 = ssub.s32 512, 512
          %1849 = vsyncadd %s1823, %s1848
          %s1850 = smul.addr %s1846, 128
          %s1851 = scalar_lea.hbm %s12, %s1850
          %s1852 = sshll.u32 %s1826, 4
          %s1853 = int_to_ptr.vmem [resolvable:$true] %s1852
          %1858 = dma.vmem_to_hbm [thread:$0]  %s1853, 512, %s1851, %s1823, 128, 128, 8
        $region100: #{tpu_custom_call.1} parent=63 // pred_fallthru
          _
      $region64: #{tpu_custom_call.1} parent=5 // pred_fallthru
        _
      %p1859 = scmp.le.s32.totalorder 2, %s33
      // Predicated region
      $region101: #{tpu_custom_call.1} parent=5 // pred_check
        %p1860 = pneg %p1859
      $region102: #{tpu_custom_call.1} parent=5 // pred_check_branch
        %1862 = sbr.rel (%p1860) target = $region104
      $region103: #{tpu_custom_call.1} parent=5 // pred_region
        %s1863 = ssub.s32 %s33, 2
        // Predicated region
        $region105: #{tpu_custom_call.1} parent=103 // pred_check
          %p1864 = pneg %p308
        $region106: #{tpu_custom_call.1} parent=103 // pred_check_branch
          %1866 = sbr.rel (%p1864) target = $region108
        $region107: #{tpu_custom_call.1} parent=103 // pred_region
          %s1867 = sand.u32 %s293, 1
          %s1868 = scalar_lea.sflag [#allocation4], %s1867
          %s1869 = sand.u32 %s293, 1
          %s1870 = smul.addr %s1869, 32
          %s1871 = scalar_lea.vmem [#allocation14], %s1870
          %1872 = dma.done %s1868, 512
        $region108: #{tpu_custom_call.1} parent=103 // pred_fallthru
          _
        // Predicated region
        $region109: #{tpu_custom_call.1} parent=103 // pred_check
          %p1873 = pneg %p334
        $region110: #{tpu_custom_call.1} parent=103 // pred_check_branch
          %1875 = sbr.rel (%p1873) target = $region112
        $region111: #{tpu_custom_call.1} parent=103 // pred_region
          %s1876 = sand.u32 %s319, 1
          %s1877 = scalar_lea.sflag [#allocation16], %s1876
          %s1878 = sand.u32 %s319, 1
          %s1879 = smul.addr %s1878, 32
          %s1880 = scalar_lea.vmem [#allocation15], %s1879
          %1881 = dma.done %s1877, 512
        $region112: #{tpu_custom_call.1} parent=103 // pred_fallthru
          _
      $region104: #{tpu_custom_call.1} parent=5 // pred_fallthru
        _
    $region6: #{tpu_custom_call.1} parent=1 // loop_footer
      %s37 = sadd.s32 1, %s33
    $region7: #{tpu_custom_call.1} parent=1 // loop_footer_branch
      %32 = sbr.rel target = $region3
    $region8: #{tpu_custom_call.1} parent=1 // loop_exit
      _
    %1882 = vsyncpa [#allocation3], 1
    %s1883 = scalar_lea.sflag [#allocation3], 1
    %1884 = vsyncpa %s1883, 1
    %1885 = vsyncpa [#allocation6], 1
    %s1886 = scalar_lea.sflag [#allocation6], 1
    %1887 = vsyncpa %s1886, 1
    %1888 = vsyncpa [#allocation9], 1
    %1889 = vsyncpa [#allocation12], 1
    %1890 = vsyncpa [#allocation4], 1
    %s1891 = scalar_lea.sflag [#allocation4], 1
    %1892 = vsyncpa %s1891, 1
    %1893 = vsyncpa [#allocation16], 1
    %s1894 = scalar_lea.sflag [#allocation16], 1
    %1895 = vsyncpa %s1894, 1

</llo_original>
